<compile_context>
chip_gen: v7x
topology: tpu7x:2x2x1
jax: 0.10.0
libtpu: 0.0.40
codegen_flags: <defaults>
</compile_context>

<pallas_src>
import functools

import jax
import jax.numpy as jnp
import numpy as np
from jax import lax
from jax.experimental import pallas as pl
from jax.experimental.pallas import tpu as pltpu


# ----------------------------------------------------------------------------
# Fused decoder-block kernel: one (batch, row-tile) grid step per invocation.
# ----------------------------------------------------------------------------
def _decoder_block_kernel(
    xm_ref, xp_ref, xn_ref,     # x (2x row-duplicated, lane-dense): tile / prev-8 / next-8 rows
    sm_ref, sp_ref, sn_ref,     # skip (lane-dense):                 tile / prev-8 / next-8 rows
    t_ref,                      # (W*Cin, 2*W2*Cin)  bf16  banded transconv weights (both parities)
    tb_ref,                     # (1, W2*Cin)        f32   transconv bias, lane-tiled
    b1_ref,                     # (k, W2*Ccat, W2*Cout) bf16  banded conv1 weights (kw+W folded)
    b1b_ref,                    # (1, W2*Cout)       f32
    b2_ref,                     # (k, W2*Cout, W2*Cout) bf16  banded conv2 weights
    b2b_ref,                    # (1, W2*Cout)       f32
    o_ref,                      # (1, th2, W2*Cout)  f32   lane-dense output slab
    cat_ref,                    # VMEM (rc, W2*Ccat) bf16  cat(up, skip) row window
    y1_ref,                     # VMEM (ry, W2*Cout) bf16  conv1 output row window
    *, th2, h, ksz, h2, n_tiles, neg_slope,
):
    f32 = jnp.float32
    bf16 = jnp.bfloat16
    i = pl.program_id(1)
    rc = th2 + 4 * h            # cat window rows (conv1 input, incl. recompute halo)
    ry = th2 + 2 * h            # conv1 output rows (conv2 input)
    nup = tb_ref.shape[1]       # W2*Cin lanes of the "up" half of cat
    ncat = cat_ref.shape[1]
    nco = b1b_ref.shape[1]      # W2*Cout

    tmat = t_ref[...]
    tbias = tb_ref[...]

    # ---- ConvTranspose2d(2x2, stride 2): one banded matmul per row piece ----
    # Both kh parities are produced side by side (lanes [0:nup] / [nup:2*nup]);
    # the row parity of every window row is static (th2, 2*h even), so a
    # static iota mask selects the right half.  Out-of-image halo rows (which
    # are the convs' zero padding, not transconv(0)+bias) are zeroed.
    def upsample(xpiece, pred):
        m = xpiece.shape[0]
        av = jnp.dot(xpiece.astype(bf16), tmat, preferred_element_type=f32)
        par = lax.broadcasted_iota(jnp.int32, (m, 1), 0) % 2
        u = jnp.where(par == 0, av[:, :nup], av[:, nup:]) + tbias
        if pred is not None:
            u = jnp.where(pred, u, 0.0)
        return u.astype(bf16)

    top_ok = i > 0                  # top halo rows are in-image?
    bot_ok = i < n_tiles - 1        # bottom halo rows are in-image?

    cat_ref[0:2 * h, 0:nup] = upsample(xp_ref[0, 8 - 2 * h:8, :], top_ok)
    cat_ref[2 * h:2 * h + th2, 0:nup] = upsample(xm_ref[0], None)
    cat_ref[2 * h + th2:rc, 0:nup] = upsample(xn_ref[0, 0:2 * h, :], bot_ok)

    # ---- channel concat with skip: lane block [nup:ncat] of the same window -
    cat_ref[0:2 * h, nup:ncat] = jnp.where(
        top_ok, sp_ref[0, 8 - 2 * h:8, :], 0.0).astype(bf16)
    cat_ref[2 * h:2 * h + th2, nup:ncat] = sm_ref[0].astype(bf16)
    cat_ref[2 * h + th2:rc, nup:ncat] = jnp.where(
        bot_ok, sn_ref[0, 0:2 * h, :], 0.0).astype(bf16)

    # ---- conv1 (k x k, 'same') + bias + LeakyReLU ----------------------------
    # kw taps + W axis are folded into the banded weights => k matmuls, K=W2*Ccat.
    acc1 = jnp.zeros((ry, nco), f32)
    for a in range(ksz):
        acc1 = acc1 + jnp.dot(cat_ref[a:a + ry, :], b1_ref[a],
                              preferred_element_type=f32)
    y1 = acc1 + b1b_ref[...]
    y1 = jnp.where(y1 >= 0, y1, neg_slope * y1)
    r1 = lax.broadcasted_iota(jnp.int32, (ry, 1), 0)
    gr1 = i * th2 - h + r1                              # global image row of each y1 row
    y1 = jnp.where((gr1 >= 0) & (gr1 < h2), y1, 0.0)    # conv2's zero padding rows
    y1_ref[...] = y1.astype(bf16)

    # ---- conv2 (k x k, 'same') + bias + LeakyReLU -> lane-dense output -------
    acc2 = jnp.zeros((th2, nco), f32)
    for a in range(ksz):
        acc2 = acc2 + jnp.dot(y1_ref[a:a + th2, :], b2_ref[a],
                              preferred_element_type=f32)
    out = acc2 + b2b_ref[...]
    out = jnp.where(out >= 0, out, neg_slope * out)
    o_ref[0] = out.astype(o_ref.dtype)


def _pick_tile_rows(h2, cap=64):
    """Largest multiple-of-8 divisor of h2 that is <= cap."""
    best = None
    for cand in range(8, min(cap, h2) + 1, 8):
        if h2 % cand == 0:
            best = cand
    assert best is not None, "H2 must be a multiple of 8"
    return best


# ----------------------------------------------------------------------------
# DecoderBLock.forward(skip, x)  (NCHW in / NCHW out, as in PyTorch)
# ----------------------------------------------------------------------------
def decoder_block_forward(params, skip_nchw, x_nchw, *, tile_rows=None):
    f32, bf16 = jnp.float32, jnp.bfloat16
    tw, tb = params["tw"], params["tb"]
    w1, b1 = params["w1"], params["b1"]
    w2, b2 = params["w2"], params["b2"]

    B, cin, H, W = x_nchw.shape
    _, cskip, H2, W2 = skip_nchw.shape
    assert H2 == 2 * H and W2 == 2 * W
    assert tw.shape == (cin, cin, 2, 2)
    ccat = cin + cskip
    cout, wc1, ksz, ksz2 = w1.shape
    assert wc1 == ccat and ksz == ksz2
    assert ksz % 2 == 1 and ksz <= 9, "'same' padding for odd k, halo <= 8 rows"
    h = ksz // 2
    assert H2 % 8 == 0

    th2 = tile_rows if tile_rows is not None else _pick_tile_rows(H2)
    assert H2 % th2 == 0 and th2 % 8 == 0
    n_tiles = H2 // th2
    r8, nrow8 = th2 // 8, H2 // 8
    rc, ry = th2 + 4 * h, th2 + 2 * h

    # ---- lane-dense activations (NCHW -> (B, rows, W*C)); x rows duplicated 2x
    x_ld = jnp.transpose(x_nchw, (0, 2, 3, 1)).reshape(B, H, W * cin)
    x_ld = jnp.repeat(x_ld, 2, axis=1).astype(f32)                 # (B, H2, W*cin)
    skip_ld = jnp.transpose(skip_nchw, (0, 2, 3, 1)).reshape(B, H2, W2 * cskip).astype(f32)

    # ---- banded (block-Toeplitz) weight packing (tiny, wrapper side) ---------
    # transconv: T[w*cin+cj, kh*(W2*cin) + p*cin + ci] = tw[cj,ci,kh,kw], p = 2w+kw
    p_idx, w_idx, kw_idx = jnp.arange(W2), jnp.arange(W), jnp.arange(2)
    oh_t = (p_idx[None, None, :] ==
            2 * w_idx[:, None, None] + kw_idx[None, :, None]).astype(f32)      # (W,2,W2)
    t_mat = jnp.einsum('wkp,jihk->wjhpi', oh_t, tw.astype(f32))
    t_mat = t_mat.reshape(W * cin, 2 * W2 * cin).astype(bf16)
    tb_lane = jnp.tile(tb.astype(f32), W2).reshape(1, W2 * cin)

    # convs: band[c_in, b, c_out] = (c_in == c_out + b - h)  ('same' zero pad built in)
    cpos, b_idx = jnp.arange(W2), jnp.arange(ksz)
    band = (cpos[:, None, None] ==
            cpos[None, None, :] + b_idx[None, :, None] - h).astype(f32)        # (W2,k,W2)

    def banded(w):  # w: (cout, cin_w, k, k) -> (k, W2*cin_w, W2*cout)
        m = jnp.einsum('cbd,ojab->acjdo', band, w.astype(f32))
        return m.reshape(ksz, W2 * w.shape[1], W2 * w.shape[0]).astype(bf16)

    b1_banded = jnp.concatenate([banded(w1[:, :cin]), banded(w1[:, cin:])], axis=1)
    b2_banded = banded(w2)
    b1_lane = jnp.tile(b1.astype(f32), W2).reshape(1, W2 * cout)
    b2_lane = jnp.tile(b2.astype(f32), W2).reshape(1, W2 * cout)

    kernel = functools.partial(
        _decoder_block_kernel,
        th2=th2, h=h, ksz=ksz, h2=H2, n_tiles=n_tiles, neg_slope=0.2)

    # main row-tile window + the neighbouring 8-row blocks holding the halo rows
    def main_map(b, i):
        return (b, i, 0)

    def prev_map(b, i):
        return (b, jnp.maximum(i * r8 - 1, 0), 0)

    def next_map(b, i):
        return (b, jnp.minimum((i + 1) * r8, nrow8 - 1), 0)

    const2 = lambda b, i: (0, 0)
    const3 = lambda b, i: (0, 0, 0)

    flops = int(2 * B * H2 * ((W * cin) * (2 * W2 * cin)
                              + ksz * (W2 * ccat) * (W2 * cout)
                              + ksz * (W2 * cout) * (W2 * cout)))
    bytes_accessed = int(
        4 * (B * H2 * W * cin + B * H2 * W2 * cskip + B * H2 * W2 * cout)
        + 2 * (t_mat.size + b1_banded.size + b2_banded.size)
        + 4 * (tb_lane.size + b1_lane.size + b2_lane.size))

    out_flat = pl.pallas_call(
        kernel,
        out_shape=jax.ShapeDtypeStruct((B, H2, W2 * cout), f32),
        grid=(B, n_tiles),
        in_specs=[
            pl.BlockSpec((1, th2, W * cin), main_map),
            pl.BlockSpec((1, 8, W * cin), prev_map),
            pl.BlockSpec((1, 8, W * cin), next_map),
            pl.BlockSpec((1, th2, W2 * cskip), main_map),
            pl.BlockSpec((1, 8, W2 * cskip), prev_map),
            pl.BlockSpec((1, 8, W2 * cskip), next_map),
            pl.BlockSpec((W * cin, 2 * W2 * cin), const2),
            pl.BlockSpec((1, W2 * cin), const2),
            pl.BlockSpec((ksz, W2 * ccat, W2 * cout), const3),
            pl.BlockSpec((1, W2 * cout), const2),
            pl.BlockSpec((ksz, W2 * cout, W2 * cout), const3),
            pl.BlockSpec((1, W2 * cout), const2),
        ],
        out_specs=pl.BlockSpec((1, th2, W2 * cout), main_map),
        scratch_shapes=[
            pltpu.VMEM((rc, W2 * ccat), bf16),
            pltpu.VMEM((ry, W2 * cout), bf16),
        ],
        compiler_params=pltpu.CompilerParams(
            dimension_semantics=("parallel", "parallel"),
            vmem_limit_bytes=32 * 1024 * 1024),
        cost_estimate=pl.CostEstimate(
            flops=flops, transcendentals=0, bytes_accessed=bytes_accessed),
    )(x_ld, x_ld, x_ld, skip_ld, skip_ld, skip_ld,
      t_mat, tb_lane, b1_banded, b1_lane, b2_banded, b2_lane)

    out = out_flat.reshape(B, H2, W2, cout)
    return jnp.transpose(out, (0, 3, 1, 2))        # back to NCHW


# ----------------------------------------------------------------------------
# Pure-JAX reference (lax.conv), used only to validate the Pallas path.
# ----------------------------------------------------------------------------
def reference_forward(params, skip_nchw, x_nchw):
    skip = jnp.transpose(skip_nchw, (0, 2, 3, 1))
    x = jnp.transpose(x_nchw, (0, 2, 3, 1))

    wt = params["tw"]                                   # (Cin, Cout, 2, 2)
    w_hwio = jnp.transpose(wt, (2, 3, 0, 1))[::-1, ::-1, :, :]
    dn = lax.conv_dimension_numbers(x.shape, w_hwio.shape, ("NHWC", "HWIO", "NHWC"))
    y = lax.conv_general_dilated(x, w_hwio, window_strides=(1, 1),
                                 padding=[(1, 1), (1, 1)], lhs_dilation=(2, 2),
                                 dimension_numbers=dn) + params["tb"]
    y = jnp.concatenate([y, skip], axis=-1)

    def conv(z, w, b):
        wh = jnp.transpose(w, (2, 3, 1, 0))
        d = lax.conv_dimension_numbers(z.shape, wh.shape, ("NHWC", "HWIO", "NHWC"))
        out = lax.conv_general_dilated(z, wh, (1, 1), "SAME", dimension_numbers=d) + b
        return jnp.where(out >= 0, out, 0.2 * out)

    y = conv(y, params["w1"], params["b1"])
    y = conv(y, params["w2"], params["b2"])
    return jnp.transpose(y, (0, 3, 1, 2))


if __name__ == "__main__":
    # DecoderBLock(input_channel=8, concatenated_channel=16, output_channel=8,
    #              kernel_size=3); skip channels = 16 - 8 = 8.
    B = 2
    Cin, Ccat, Cout, K = 8, 16, 8, 3
    Cskip = Ccat - Cin
    Hx, Wx = 8, 8            # low-res input -> 16x16 after the transposed conv
    key = jax.random.PRNGKey(0)
    ks = jax.random.split(key, 8)

    params = {
        "tw": 0.1 * jax.random.normal(ks[0], (Cin, Cin, 2, 2), jnp.float32),
        "tb": 0.1 * jax.random.normal(ks[1], (Cin,), jnp.float32),
        "w1": 0.1 * jax.random.normal(ks[2], (Cout, Ccat, K, K), jnp.float32),
        "b1": 0.1 * jax.random.normal(ks[3], (Cout,), jnp.float32),
        "w2": 0.1 * jax.random.normal(ks[4], (Cout, Cout, K, K), jnp.float32),
        "b2": 0.1 * jax.random.normal(ks[5], (Cout,), jnp.float32),
    }

    x = jax.random.normal(ks[6], (B, Cin, Hx, Wx), jnp.float32)               # NCHW
    skip = jax.random.normal(ks[7], (B, Cskip, 2 * Hx, 2 * Wx), jnp.float32)  # NCHW

    ref = jax.block_until_ready(reference_forward(params, skip, x))

    # Default tiling: single row tile for this tiny problem (per review item 13).
    fwd = jax.jit(decoder_block_forward)
    out = jax.block_until_ready(fwd(params, skip, x))
    assert out.shape == (B, Cout, 2 * Hx, 2 * Wx), out.shape
    np.testing.assert_allclose(np.asarray(out), np.asarray(ref), rtol=3e-2, atol=3e-2)

    # Also exercise the multi-row-tile path (halo views + edge masking).
    fwd2 = jax.jit(functools.partial(decoder_block_forward, tile_rows=8))
    out2 = jax.block_until_ready(fwd2(params, skip, x))
    np.testing.assert_allclose(np.asarray(out2), np.asarray(ref), rtol=3e-2, atol=3e-2)

    print("KERNEL_OK")
</pallas_src>

<mosaic_0001>
module attributes {stable_mosaic.version = 11 : i64} {
  func.func @_decoder_block_kernel(%arg0: i32, %arg1: i32, %arg2: memref<1x16x64xf32, #tpu.memory_space<vmem>>, %arg3: memref<1x8x64xf32, #tpu.memory_space<vmem>>, %arg4: memref<1x8x64xf32, #tpu.memory_space<vmem>>, %arg5: memref<1x16x128xf32, #tpu.memory_space<vmem>>, %arg6: memref<1x8x128xf32, #tpu.memory_space<vmem>>, %arg7: memref<1x8x128xf32, #tpu.memory_space<vmem>>, %arg8: memref<64x256xbf16, #tpu.memory_space<vmem>>, %arg9: memref<1x128xf32, #tpu.memory_space<vmem>>, %arg10: memref<3x256x128xbf16, #tpu.memory_space<vmem>>, %arg11: memref<1x128xf32, #tpu.memory_space<vmem>>, %arg12: memref<3x128x128xbf16, #tpu.memory_space<vmem>>, %arg13: memref<1x128xf32, #tpu.memory_space<vmem>>, %arg14: memref<1x16x128xf32, #tpu.memory_space<vmem>>, %arg15: memref<20x256xbf16, #tpu.memory_space<vmem>>, %arg16: memref<18x128xbf16, #tpu.memory_space<vmem>>) attributes {dimension_semantics = [#tpu.dimension_semantics<parallel>, #tpu.dimension_semantics<parallel>], iteration_bounds = array<i64: 2, 1>, scalar_prefetch = 0 : i64, scratch_operands = 2 : i64, tpu.core_type = #tpu.core_type<tc>, window_params = [{transform_indices = @transform_0, window_bounds = array<i64: 1, 16, 64>}, {transform_indices = @transform_1, window_bounds = array<i64: 1, 8, 64>}, {transform_indices = @transform_2, window_bounds = array<i64: 1, 8, 64>}, {transform_indices = @transform_3, window_bounds = array<i64: 1, 16, 128>}, {transform_indices = @transform_4, window_bounds = array<i64: 1, 8, 128>}, {transform_indices = @transform_5, window_bounds = array<i64: 1, 8, 128>}, {pipeline_mode = #tpu.pipeline_mode<synchronous>, transform_indices = @transform_6, window_bounds = array<i64: 64, 256>}, {pipeline_mode = #tpu.pipeline_mode<synchronous>, transform_indices = @transform_7, window_bounds = array<i64: 1, 128>}, {pipeline_mode = #tpu.pipeline_mode<synchronous>, transform_indices = @transform_8, window_bounds = array<i64: 3, 256, 128>}, {pipeline_mode = #tpu.pipeline_mode<synchronous>, transform_indices = @transform_9, window_bounds = array<i64: 1, 128>}, {pipeline_mode = #tpu.pipeline_mode<synchronous>, transform_indices = @transform_10, window_bounds = array<i64: 3, 128, 128>}, {pipeline_mode = #tpu.pipeline_mode<synchronous>, transform_indices = @transform_11, window_bounds = array<i64: 1, 128>}, {transform_indices = @transform_12, window_bounds = array<i64: 1, 16, 128>}]} {
    %c0 = arith.constant 0 : index
    %c0_0 = arith.constant 0 : index
    %0 = vector.load %arg8[%c0, %c0_0] : memref<64x256xbf16, #tpu.memory_space<vmem>>, vector<64x256xbf16>
    %c0_1 = arith.constant 0 : index
    %c0_2 = arith.constant 0 : index
    %1 = vector.load %arg9[%c0_1, %c0_2] : memref<1x128xf32, #tpu.memory_space<vmem>>, vector<1x128xf32>
    %c0_i32 = arith.constant 0 : i32
    %2 = arith.cmpi sgt, %arg1, %c0_i32 : i32
    %c0_i32_3 = arith.constant 0 : i32
    %3 = arith.cmpi slt, %arg1, %c0_i32_3 : i32
    %c0_4 = arith.constant 0 : index
    %c6 = arith.constant 6 : index
    %c0_5 = arith.constant 0 : index
    %4 = vector.load %arg3[%c0_4, %c6, %c0_5] : memref<1x8x64xf32, #tpu.memory_space<vmem>>, vector<1x2x64xf32>
    %5 = vector.shape_cast %4 : vector<1x2x64xf32> to vector<2x64xf32>
    %6 = arith.truncf %5 : vector<2x64xf32> to vector<2x64xbf16>
    %cst = arith.constant dense<0.000000e+00> : vector<2x256xf32>
    %7 = tpu.matmul %6, %0, %cst {dimension_numbers = #tpu.dot_dimension_numbers<[1], [0], [0], [1], [0, 0, 1, 1], [], []>} : vector<2x64xbf16>, vector<64x256xbf16>, vector<2x256xf32> -> vector<2x256xf32>
    %8 = tpu.iota {dimensions = array<i32: 0>} : vector<2x1xi32>
    %c2_i32 = arith.constant 2 : i32
    %c0_i32_6 = arith.constant 0 : i32
    %9 = arith.cmpi eq, %c2_i32, %c0_i32_6 : i32
    %c1_i32 = arith.constant 1 : i32
    %10 = arith.select %9, %c1_i32, %c2_i32 : i32
    %11 = vector.broadcast %10 : i32 to vector<2x1xi32>
    %12 = arith.remsi %8, %11 : vector<2x1xi32>
    %c0_i32_7 = arith.constant 0 : i32
    %13 = vector.broadcast %c0_i32_7 : i32 to vector<2x1xi32>
    %14 = arith.cmpi ne, %12, %13 : vector<2x1xi32>
    %c0_i32_8 = arith.constant 0 : i32
    %15 = vector.broadcast %c0_i32_8 : i32 to vector<2x1xi32>
    %16 = arith.cmpi slt, %12, %15 : vector<2x1xi32>
    %c0_i32_9 = arith.constant 0 : i32
    %17 = arith.cmpi slt, %10, %c0_i32_9 : i32
    %18 = vector.broadcast %17 : i1 to vector<2x1xi1>
    %19 = vector.broadcast %18 : vector<2x1xi1> to vector<2x1xi1>
    %20 = arith.xori %16, %19 : vector<2x1xi1>
    %21 = arith.andi %20, %14 : vector<2x1xi1>
    %22 = vector.broadcast %10 : i32 to vector<2x1xi32>
    %23 = arith.addi %12, %22 : vector<2x1xi32>
    %24 = arith.select %21, %23, %12 : vector<2x1xi1>, vector<2x1xi32>
    %c0_i32_10 = arith.constant 0 : i32
    %25 = vector.broadcast %c0_i32_10 : i32 to vector<2x1xi32>
    %26 = arith.cmpi eq, %24, %25 : vector<2x1xi32>
    %27 = vector.extract_strided_slice %7 {offsets = [0, 0], sizes = [2, 128], strides = [1, 1]} : vector<2x256xf32> to vector<2x128xf32>
    %28 = vector.extract_strided_slice %7 {offsets = [0, 128], sizes = [2, 128], strides = [1, 1]} : vector<2x256xf32> to vector<2x128xf32>
    %29 = vector.shape_cast %26 : vector<2x1xi1> to vector<2x1xi1>
    %30 = vector.broadcast %29 : vector<2x1xi1> to vector<2x128xi1>
    %31 = arith.select %30, %27, %28 : vector<2x128xi1>, vector<2x128xf32>
    %32 = vector.broadcast %1 : vector<1x128xf32> to vector<2x128xf32>
    %33 = arith.addf %31, %32 : vector<2x128xf32>
    %cst_11 = arith.constant 0.000000e+00 : f32
    %34 = vector.broadcast %cst_11 : f32 to vector<2x128xf32>
    %35 = arith.select %2, %33, %34 : vector<2x128xf32>
    %36 = arith.truncf %35 : vector<2x128xf32> to vector<2x128xbf16>
    %c0_12 = arith.constant 0 : index
    %c0_13 = arith.constant 0 : index
    %37 = vector.load %arg15[%c0_12, %c0_13] : memref<20x256xbf16, #tpu.memory_space<vmem>>, vector<2x128xbf16>
    tpu.vector_store %arg15[%c0_12, %c0_13], %36 {strides = array<i32>} : memref<20x256xbf16, #tpu.memory_space<vmem>>, vector<2x128xbf16>,
    %c0_14 = arith.constant 0 : index
    %c0_15 = arith.constant 0 : index
    %c0_16 = arith.constant 0 : index
    %38 = vector.load %arg2[%c0_14, %c0_15, %c0_16] : memref<1x16x64xf32, #tpu.memory_space<vmem>>, vector<1x16x64xf32>
    %39 = vector.shape_cast %38 : vector<1x16x64xf32> to vector<16x64xf32>
    %40 = arith.truncf %39 : vector<16x64xf32> to vector<16x64xbf16>
    %cst_17 = arith.constant dense<0.000000e+00> : vector<16x256xf32>
    %41 = tpu.matmul %40, %0, %cst_17 {dimension_numbers = #tpu.dot_dimension_numbers<[1], [0], [0], [1], [0, 0, 1, 1], [], []>} : vector<16x64xbf16>, vector<64x256xbf16>, vector<16x256xf32> -> vector<16x256xf32>
    %42 = tpu.iota {dimensions = array<i32: 0>} : vector<16x1xi32>
    %c2_i32_18 = arith.constant 2 : i32
    %c0_i32_19 = arith.constant 0 : i32
    %43 = arith.cmpi eq, %c2_i32_18, %c0_i32_19 : i32
    %c1_i32_20 = arith.constant 1 : i32
    %44 = arith.select %43, %c1_i32_20, %c2_i32_18 : i32
    %45 = vector.broadcast %44 : i32 to vector<16x1xi32>
    %46 = arith.remsi %42, %45 : vector<16x1xi32>
    %c0_i32_21 = arith.constant 0 : i32
    %47 = vector.broadcast %c0_i32_21 : i32 to vector<16x1xi32>
    %48 = arith.cmpi ne, %46, %47 : vector<16x1xi32>
    %c0_i32_22 = arith.constant 0 : i32
    %49 = vector.broadcast %c0_i32_22 : i32 to vector<16x1xi32>
    %50 = arith.cmpi slt, %46, %49 : vector<16x1xi32>
    %c0_i32_23 = arith.constant 0 : i32
    %51 = arith.cmpi slt, %44, %c0_i32_23 : i32
    %52 = vector.broadcast %51 : i1 to vector<16x1xi1>
    %53 = vector.broadcast %52 : vector<16x1xi1> to vector<16x1xi1>
    %54 = arith.xori %50, %53 : vector<16x1xi1>
    %55 = arith.andi %54, %48 : vector<16x1xi1>
    %56 = vector.broadcast %44 : i32 to vector<16x1xi32>
    %57 = arith.addi %46, %56 : vector<16x1xi32>
    %58 = arith.select %55, %57, %46 : vector<16x1xi1>, vector<16x1xi32>
    %c0_i32_24 = arith.constant 0 : i32
    %59 = vector.broadcast %c0_i32_24 : i32 to vector<16x1xi32>
    %60 = arith.cmpi eq, %58, %59 : vector<16x1xi32>
    %61 = vector.extract_strided_slice %41 {offsets = [0, 0], sizes = [16, 128], strides = [1, 1]} : vector<16x256xf32> to vector<16x128xf32>
    %62 = vector.extract_strided_slice %41 {offsets = [0, 128], sizes = [16, 128], strides = [1, 1]} : vector<16x256xf32> to vector<16x128xf32>
    %63 = vector.shape_cast %60 : vector<16x1xi1> to vector<16x1xi1>
    %64 = vector.broadcast %63 : vector<16x1xi1> to vector<16x128xi1>
    %65 = arith.select %64, %61, %62 : vector<16x128xi1>, vector<16x128xf32>
    %66 = vector.broadcast %1 : vector<1x128xf32> to vector<16x128xf32>
    %67 = arith.addf %65, %66 : vector<16x128xf32>
    %68 = arith.truncf %67 : vector<16x128xf32> to vector<16x128xbf16>
    %c2 = arith.constant 2 : index
    %c0_25 = arith.constant 0 : index
    %69 = vector.load %arg15[%c2, %c0_25] : memref<20x256xbf16, #tpu.memory_space<vmem>>, vector<16x128xbf16>
    tpu.vector_store %arg15[%c2, %c0_25], %68 {strides = array<i32>} : memref<20x256xbf16, #tpu.memory_space<vmem>>, vector<16x128xbf16>,
    %c0_26 = arith.constant 0 : index
    %c0_27 = arith.constant 0 : index
    %c0_28 = arith.constant 0 : index
    %70 = vector.load %arg4[%c0_26, %c0_27, %c0_28] : memref<1x8x64xf32, #tpu.memory_space<vmem>>, vector<1x2x64xf32>
    %71 = vector.shape_cast %70 : vector<1x2x64xf32> to vector<2x64xf32>
    %72 = arith.truncf %71 : vector<2x64xf32> to vector<2x64xbf16>
    %cst_29 = arith.constant dense<0.000000e+00> : vector<2x256xf32>
    %73 = tpu.matmul %72, %0, %cst_29 {dimension_numbers = #tpu.dot_dimension_numbers<[1], [0], [0], [1], [0, 0, 1, 1], [], []>} : vector<2x64xbf16>, vector<64x256xbf16>, vector<2x256xf32> -> vector<2x256xf32>
    %74 = tpu.iota {dimensions = array<i32: 0>} : vector<2x1xi32>
    %c2_i32_30 = arith.constant 2 : i32
    %c0_i32_31 = arith.constant 0 : i32
    %75 = arith.cmpi eq, %c2_i32_30, %c0_i32_31 : i32
    %c1_i32_32 = arith.constant 1 : i32
    %76 = arith.select %75, %c1_i32_32, %c2_i32_30 : i32
    %77 = vector.broadcast %76 : i32 to vector<2x1xi32>
    %78 = arith.remsi %74, %77 : vector<2x1xi32>
    %c0_i32_33 = arith.constant 0 : i32
    %79 = vector.broadcast %c0_i32_33 : i32 to vector<2x1xi32>
    %80 = arith.cmpi ne, %78, %79 : vector<2x1xi32>
    %c0_i32_34 = arith.constant 0 : i32
    %81 = vector.broadcast %c0_i32_34 : i32 to vector<2x1xi32>
    %82 = arith.cmpi slt, %78, %81 : vector<2x1xi32>
    %c0_i32_35 = arith.constant 0 : i32
    %83 = arith.cmpi slt, %76, %c0_i32_35 : i32
    %84 = vector.broadcast %83 : i1 to vector<2x1xi1>
    %85 = vector.broadcast %84 : vector<2x1xi1> to vector<2x1xi1>
    %86 = arith.xori %82, %85 : vector<2x1xi1>
    %87 = arith.andi %86, %80 : vector<2x1xi1>
    %88 = vector.broadcast %76 : i32 to vector<2x1xi32>
    %89 = arith.addi %78, %88 : vector<2x1xi32>
    %90 = arith.select %87, %89, %78 : vector<2x1xi1>, vector<2x1xi32>
    %c0_i32_36 = arith.constant 0 : i32
    %91 = vector.broadcast %c0_i32_36 : i32 to vector<2x1xi32>
    %92 = arith.cmpi eq, %90, %91 : vector<2x1xi32>
    %93 = vector.extract_strided_slice %73 {offsets = [0, 0], sizes = [2, 128], strides = [1, 1]} : vector<2x256xf32> to vector<2x128xf32>
    %94 = vector.extract_strided_slice %73 {offsets = [0, 128], sizes = [2, 128], strides = [1, 1]} : vector<2x256xf32> to vector<2x128xf32>
    %95 = vector.shape_cast %92 : vector<2x1xi1> to vector<2x1xi1>
    %96 = vector.broadcast %95 : vector<2x1xi1> to vector<2x128xi1>
    %97 = arith.select %96, %93, %94 : vector<2x128xi1>, vector<2x128xf32>
    %98 = vector.broadcast %1 : vector<1x128xf32> to vector<2x128xf32>
    %99 = arith.addf %97, %98 : vector<2x128xf32>
    %cst_37 = arith.constant 0.000000e+00 : f32
    %100 = vector.broadcast %cst_37 : f32 to vector<2x128xf32>
    %101 = arith.select %3, %99, %100 : vector<2x128xf32>
    %102 = arith.truncf %101 : vector<2x128xf32> to vector<2x128xbf16>
    %c18 = arith.constant 18 : index
    %c0_38 = arith.constant 0 : index
    %103 = vector.load %arg15[%c18, %c0_38] : memref<20x256xbf16, #tpu.memory_space<vmem>>, vector<2x128xbf16>
    tpu.vector_store %arg15[%c18, %c0_38], %102 {strides = array<i32>} : memref<20x256xbf16, #tpu.memory_space<vmem>>, vector<2x128xbf16>,
    %c0_39 = arith.constant 0 : index
    %c6_40 = arith.constant 6 : index
    %c0_41 = arith.constant 0 : index
    %104 = vector.load %arg6[%c0_39, %c6_40, %c0_41] : memref<1x8x128xf32, #tpu.memory_space<vmem>>, vector<1x2x128xf32>
    %105 = vector.shape_cast %104 : vector<1x2x128xf32> to vector<2x128xf32>
    %cst_42 = arith.constant 0.000000e+00 : f32
    %106 = vector.broadcast %cst_42 : f32 to vector<2x128xf32>
    %107 = arith.select %2, %105, %106 : vector<2x128xf32>
    %108 = arith.truncf %107 : vector<2x128xf32> to vector<2x128xbf16>
    %c0_43 = arith.constant 0 : index
    %c128 = arith.constant 128 : index
    %109 = vector.load %arg15[%c0_43, %c128] : memref<20x256xbf16, #tpu.memory_space<vmem>>, vector<2x128xbf16>
    tpu.vector_store %arg15[%c0_43, %c128], %108 {strides = array<i32>} : memref<20x256xbf16, #tpu.memory_space<vmem>>, vector<2x128xbf16>,
    %c0_44 = arith.constant 0 : index
    %c0_45 = arith.constant 0 : index
    %c0_46 = arith.constant 0 : index
    %110 = vector.load %arg5[%c0_44, %c0_45, %c0_46] : memref<1x16x128xf32, #tpu.memory_space<vmem>>, vector<1x16x128xf32>
    %111 = vector.shape_cast %110 : vector<1x16x128xf32> to vector<16x128xf32>
    %112 = arith.truncf %111 : vector<16x128xf32> to vector<16x128xbf16>
    %c2_47 = arith.constant 2 : index
    %c128_48 = arith.constant 128 : index
    %113 = vector.load %arg15[%c2_47, %c128_48] : memref<20x256xbf16, #tpu.memory_space<vmem>>, vector<16x128xbf16>
    tpu.vector_store %arg15[%c2_47, %c128_48], %112 {strides = array<i32>} : memref<20x256xbf16, #tpu.memory_space<vmem>>, vector<16x128xbf16>,
    %c0_49 = arith.constant 0 : index
    %c0_50 = arith.constant 0 : index
    %c0_51 = arith.constant 0 : index
    %114 = vector.load %arg7[%c0_49, %c0_50, %c0_51] : memref<1x8x128xf32, #tpu.memory_space<vmem>>, vector<1x2x128xf32>
    %115 = vector.shape_cast %114 : vector<1x2x128xf32> to vector<2x128xf32>
    %cst_52 = arith.constant 0.000000e+00 : f32
    %116 = vector.broadcast %cst_52 : f32 to vector<2x128xf32>
    %117 = arith.select %3, %115, %116 : vector<2x128xf32>
    %118 = arith.truncf %117 : vector<2x128xf32> to vector<2x128xbf16>
    %c18_53 = arith.constant 18 : index
    %c128_54 = arith.constant 128 : index
    %119 = vector.load %arg15[%c18_53, %c128_54] : memref<20x256xbf16, #tpu.memory_space<vmem>>, vector<2x128xbf16>
    tpu.vector_store %arg15[%c18_53, %c128_54], %118 {strides = array<i32>} : memref<20x256xbf16, #tpu.memory_space<vmem>>, vector<2x128xbf16>,
    %cst_55 = arith.constant 0.000000e+00 : f32
    %120 = vector.broadcast %cst_55 : f32 to vector<18x128xf32>
    %c0_56 = arith.constant 0 : index
    %c0_57 = arith.constant 0 : index
    %121 = vector.load %arg15[%c0_56, %c0_57] : memref<20x256xbf16, #tpu.memory_space<vmem>>, vector<18x256xbf16>
    %c0_58 = arith.constant 0 : index
    %c0_59 = arith.constant 0 : index
    %c0_60 = arith.constant 0 : index
    %122 = vector.load %arg10[%c0_58, %c0_59, %c0_60] : memref<3x256x128xbf16, #tpu.memory_space<vmem>>, vector<1x256x128xbf16>
    %123 = vector.shape_cast %122 : vector<1x256x128xbf16> to vector<256x128xbf16>
    %cst_61 = arith.constant dense<0.000000e+00> : vector<18x128xf32>
    %124 = tpu.matmul %121, %123, %cst_61 {dimension_numbers = #tpu.dot_dimension_numbers<[1], [0], [0], [1], [0, 0, 1, 1], [], []>} : vector<18x256xbf16>, vector<256x128xbf16>, vector<18x128xf32> -> vector<18x128xf32>
    %125 = arith.addf %120, %124 : vector<18x128xf32>
    %c1 = arith.constant 1 : index
    %c0_62 = arith.constant 0 : index
    %126 = vector.load %arg15[%c1, %c0_62] : memref<20x256xbf16, #tpu.memory_space<vmem>>, vector<18x256xbf16>
    %c1_63 = arith.constant 1 : index
    %c0_64 = arith.constant 0 : index
    %c0_65 = arith.constant 0 : index
    %127 = vector.load %arg10[%c1_63, %c0_64, %c0_65] : memref<3x256x128xbf16, #tpu.memory_space<vmem>>, vector<1x256x128xbf16>
    %128 = vector.shape_cast %127 : vector<1x256x128xbf16> to vector<256x128xbf16>
    %cst_66 = arith.constant dense<0.000000e+00> : vector<18x128xf32>
    %129 = tpu.matmul %126, %128, %cst_66 {dimension_numbers = #tpu.dot_dimension_numbers<[1], [0], [0], [1], [0, 0, 1, 1], [], []>} : vector<18x256xbf16>, vector<256x128xbf16>, vector<18x128xf32> -> vector<18x128xf32>
    %130 = arith.addf %125, %129 : vector<18x128xf32>
    %c2_67 = arith.constant 2 : index
    %c0_68 = arith.constant 0 : index
    %131 = vector.load %arg15[%c2_67, %c0_68] : memref<20x256xbf16, #tpu.memory_space<vmem>>, vector<18x256xbf16>
    %c2_69 = arith.constant 2 : index
    %c0_70 = arith.constant 0 : index
    %c0_71 = arith.constant 0 : index
    %132 = vector.load %arg10[%c2_69, %c0_70, %c0_71] : memref<3x256x128xbf16, #tpu.memory_space<vmem>>, vector<1x256x128xbf16>
    %133 = vector.shape_cast %132 : vector<1x256x128xbf16> to vector<256x128xbf16>
    %cst_72 = arith.constant dense<0.000000e+00> : vector<18x128xf32>
    %134 = tpu.matmul %131, %133, %cst_72 {dimension_numbers = #tpu.dot_dimension_numbers<[1], [0], [0], [1], [0, 0, 1, 1], [], []>} : vector<18x256xbf16>, vector<256x128xbf16>, vector<18x128xf32> -> vector<18x128xf32>
    %135 = arith.addf %130, %134 : vector<18x128xf32>
    %c0_73 = arith.constant 0 : index
    %c0_74 = arith.constant 0 : index
    %136 = vector.load %arg11[%c0_73, %c0_74] : memref<1x128xf32, #tpu.memory_space<vmem>>, vector<1x128xf32>
    %137 = vector.broadcast %136 : vector<1x128xf32> to vector<18x128xf32>
    %138 = arith.addf %135, %137 : vector<18x128xf32>
    %cst_75 = arith.constant 0.000000e+00 : f32
    %139 = vector.broadcast %cst_75 : f32 to vector<18x128xf32>
    %140 = arith.cmpf oge, %138, %139 : vector<18x128xf32>
    %cst_76 = arith.constant 2.000000e-01 : f32
    %141 = vector.broadcast %cst_76 : f32 to vector<18x128xf32>
    %142 = arith.mulf %141, %138 : vector<18x128xf32>
    %143 = arith.select %140, %138, %142 : vector<18x128xi1>, vector<18x128xf32>
    %144 = tpu.iota {dimensions = array<i32: 0>} : vector<18x1xi32>
    %c16_i32 = arith.constant 16 : i32
    %145 = arith.muli %arg1, %c16_i32 : i32
    %c1_i32_77 = arith.constant 1 : i32
    %146 = arith.subi %145, %c1_i32_77 : i32
    %147 = vector.broadcast %146 : i32 to vector<18x1xi32>
    %148 = arith.addi %147, %144 : vector<18x1xi32>
    %c0_i32_78 = arith.constant 0 : i32
    %149 = vector.broadcast %c0_i32_78 : i32 to vector<18x1xi32>
    %150 = arith.cmpi sge, %148, %149 : vector<18x1xi32>
    %c16_i32_79 = arith.constant 16 : i32
    %151 = vector.broadcast %c16_i32_79 : i32 to vector<18x1xi32>
    %152 = arith.cmpi slt, %148, %151 : vector<18x1xi32>
    %153 = arith.andi %150, %152 : vector<18x1xi1>
    %cst_80 = arith.constant 0.000000e+00 : f32
    %154 = vector.shape_cast %153 : vector<18x1xi1> to vector<18x1xi1>
    %155 = vector.broadcast %154 : vector<18x1xi1> to vector<18x128xi1>
    %156 = vector.broadcast %cst_80 : f32 to vector<18x128xf32>
    %157 = arith.select %155, %143, %156 : vector<18x128xi1>, vector<18x128xf32>
    %158 = arith.truncf %157 : vector<18x128xf32> to vector<18x128xbf16>
    %c0_81 = arith.constant 0 : index
    %c0_82 = arith.constant 0 : index
    %159 = vector.load %arg16[%c0_81, %c0_82] : memref<18x128xbf16, #tpu.memory_space<vmem>>, vector<18x128xbf16>
    tpu.vector_store %arg16[%c0_81, %c0_82], %158 {strides = array<i32>} : memref<18x128xbf16, #tpu.memory_space<vmem>>, vector<18x128xbf16>,
    %cst_83 = arith.constant 0.000000e+00 : f32
    %160 = vector.broadcast %cst_83 : f32 to vector<16x128xf32>
    %c0_84 = arith.constant 0 : index
    %c0_85 = arith.constant 0 : index
    %161 = vector.load %arg16[%c0_84, %c0_85] : memref<18x128xbf16, #tpu.memory_space<vmem>>, vector<16x128xbf16>
    %c0_86 = arith.constant 0 : index
    %c0_87 = arith.constant 0 : index
    %c0_88 = arith.constant 0 : index
    %162 = vector.load %arg12[%c0_86, %c0_87, %c0_88] : memref<3x128x128xbf16, #tpu.memory_space<vmem>>, vector<1x128x128xbf16>
    %163 = vector.shape_cast %162 : vector<1x128x128xbf16> to vector<128x128xbf16>
    %cst_89 = arith.constant dense<0.000000e+00> : vector<16x128xf32>
    %164 = tpu.matmul %161, %163, %cst_89 {dimension_numbers = #tpu.dot_dimension_numbers<[1], [0], [0], [1], [0, 0, 1, 1], [], []>} : vector<16x128xbf16>, vector<128x128xbf16>, vector<16x128xf32> -> vector<16x128xf32>
    %165 = arith.addf %160, %164 : vector<16x128xf32>
    %c1_90 = arith.constant 1 : index
    %c0_91 = arith.constant 0 : index
    %166 = vector.load %arg16[%c1_90, %c0_91] : memref<18x128xbf16, #tpu.memory_space<vmem>>, vector<16x128xbf16>
    %c1_92 = arith.constant 1 : index
    %c0_93 = arith.constant 0 : index
    %c0_94 = arith.constant 0 : index
    %167 = vector.load %arg12[%c1_92, %c0_93, %c0_94] : memref<3x128x128xbf16, #tpu.memory_space<vmem>>, vector<1x128x128xbf16>
    %168 = vector.shape_cast %167 : vector<1x128x128xbf16> to vector<128x128xbf16>
    %cst_95 = arith.constant dense<0.000000e+00> : vector<16x128xf32>
    %169 = tpu.matmul %166, %168, %cst_95 {dimension_numbers = #tpu.dot_dimension_numbers<[1], [0], [0], [1], [0, 0, 1, 1], [], []>} : vector<16x128xbf16>, vector<128x128xbf16>, vector<16x128xf32> -> vector<16x128xf32>
    %170 = arith.addf %165, %169 : vector<16x128xf32>
    %c2_96 = arith.constant 2 : index
    %c0_97 = arith.constant 0 : index
    %171 = vector.load %arg16[%c2_96, %c0_97] : memref<18x128xbf16, #tpu.memory_space<vmem>>, vector<16x128xbf16>
    %c2_98 = arith.constant 2 : index
    %c0_99 = arith.constant 0 : index
    %c0_100 = arith.constant 0 : index
    %172 = vector.load %arg12[%c2_98, %c0_99, %c0_100] : memref<3x128x128xbf16, #tpu.memory_space<vmem>>, vector<1x128x128xbf16>
    %173 = vector.shape_cast %172 : vector<1x128x128xbf16> to vector<128x128xbf16>
    %cst_101 = arith.constant dense<0.000000e+00> : vector<16x128xf32>
    %174 = tpu.matmul %171, %173, %cst_101 {dimension_numbers = #tpu.dot_dimension_numbers<[1], [0], [0], [1], [0, 0, 1, 1], [], []>} : vector<16x128xbf16>, vector<128x128xbf16>, vector<16x128xf32> -> vector<16x128xf32>
    %175 = arith.addf %170, %174 : vector<16x128xf32>
    %c0_102 = arith.constant 0 : index
    %c0_103 = arith.constant 0 : index
    %176 = vector.load %arg13[%c0_102, %c0_103] : memref<1x128xf32, #tpu.memory_space<vmem>>, vector<1x128xf32>
    %177 = vector.broadcast %176 : vector<1x128xf32> to vector<16x128xf32>
    %178 = arith.addf %175, %177 : vector<16x128xf32>
    %cst_104 = arith.constant 0.000000e+00 : f32
    %179 = vector.broadcast %cst_104 : f32 to vector<16x128xf32>
    %180 = arith.cmpf oge, %178, %179 : vector<16x128xf32>
    %cst_105 = arith.constant 2.000000e-01 : f32
    %181 = vector.broadcast %cst_105 : f32 to vector<16x128xf32>
    %182 = arith.mulf %181, %178 : vector<16x128xf32>
    %183 = arith.select %180, %178, %182 : vector<16x128xi1>, vector<16x128xf32>
    %c0_106 = arith.constant 0 : index
    %c0_107 = arith.constant 0 : index
    %c0_108 = arith.constant 0 : index
    %184 = vector.load %arg14[%c0_106, %c0_107, %c0_108] : memref<1x16x128xf32, #tpu.memory_space<vmem>>, vector<1x16x128xf32>
    %185 = vector.shape_cast %184 : vector<1x16x128xf32> to vector<16x128xf32>
    %186 = vector.shape_cast %183 : vector<16x128xf32> to vector<1x16x128xf32>
    tpu.vector_store %arg14[%c0_106, %c0_107, %c0_108], %186 {strides = array<i32>} : memref<1x16x128xf32, #tpu.memory_space<vmem>>, vector<1x16x128xf32>,
    return
  }
  func.func @transform_0(%arg0: i32, %arg1: i32) -> (i32, i32, i32) {
    %c0_i32 = arith.constant 0 : i32
    %c0_i32_0 = arith.constant 0 : i32
    return %arg0, %arg1, %c0_i32 : i32, i32, i32
  }
  func.func @transform_1(%arg0: i32, %arg1: i32) -> (i32, i32, i32) {
    %c2_i32 = arith.constant 2 : i32
    %0 = arith.muli %arg1, %c2_i32 : i32
    %c1_i32 = arith.constant 1 : i32
    %1 = arith.subi %0, %c1_i32 : i32
    %c0_i32 = arith.constant 0 : i32
    %2 = arith.maxsi %1, %c0_i32 : i32
    %c0_i32_0 = arith.constant 0 : i32
    %c0_i32_1 = arith.constant 0 : i32
    return %arg0, %2, %c0_i32_0 : i32, i32, i32
  }
  func.func @transform_2(%arg0: i32, %arg1: i32) -> (i32, i32, i32) {
    %c1_i32 = arith.constant 1 : i32
    %0 = arith.addi %arg1, %c1_i32 : i32
    %c2_i32 = arith.constant 2 : i32
    %1 = arith.muli %0, %c2_i32 : i32
    %c1_i32_0 = arith.constant 1 : i32
    %2 = arith.minsi %1, %c1_i32_0 : i32
    %c0_i32 = arith.constant 0 : i32
    %c0_i32_1 = arith.constant 0 : i32
    return %arg0, %2, %c0_i32 : i32, i32, i32
  }
  func.func @transform_3(%arg0: i32, %arg1: i32) -> (i32, i32, i32) {
    %c0_i32 = arith.constant 0 : i32
    %c0_i32_0 = arith.constant 0 : i32
    return %arg0, %arg1, %c0_i32 : i32, i32, i32
  }
  func.func @transform_4(%arg0: i32, %arg1: i32) -> (i32, i32, i32) {
    %c2_i32 = arith.constant 2 : i32
    %0 = arith.muli %arg1, %c2_i32 : i32
    %c1_i32 = arith.constant 1 : i32
    %1 = arith.subi %0, %c1_i32 : i32
    %c0_i32 = arith.constant 0 : i32
    %2 = arith.maxsi %1, %c0_i32 : i32
    %c0_i32_0 = arith.constant 0 : i32
    %c0_i32_1 = arith.constant 0 : i32
    return %arg0, %2, %c0_i32_0 : i32, i32, i32
  }
  func.func @transform_5(%arg0: i32, %arg1: i32) -> (i32, i32, i32) {
    %c1_i32 = arith.constant 1 : i32
    %0 = arith.addi %arg1, %c1_i32 : i32
    %c2_i32 = arith.constant 2 : i32
    %1 = arith.muli %0, %c2_i32 : i32
    %c1_i32_0 = arith.constant 1 : i32
    %2 = arith.minsi %1, %c1_i32_0 : i32
    %c0_i32 = arith.constant 0 : i32
    %c0_i32_1 = arith.constant 0 : i32
    return %arg0, %2, %c0_i32 : i32, i32, i32
  }
  func.func @transform_6(%arg0: i32, %arg1: i32) -> (i32, i32) {
    %c0_i32 = arith.constant 0 : i32
    %c0_i32_0 = arith.constant 0 : i32
    %c0_i32_1 = arith.constant 0 : i32
    return %c0_i32, %c0_i32_0 : i32, i32
  }
  func.func @transform_7(%arg0: i32, %arg1: i32) -> (i32, i32) {
    %c0_i32 = arith.constant 0 : i32
    %c0_i32_0 = arith.constant 0 : i32
    %c0_i32_1 = arith.constant 0 : i32
    return %c0_i32, %c0_i32_0 : i32, i32
  }
  func.func @transform_8(%arg0: i32, %arg1: i32) -> (i32, i32, i32) {
    %c0_i32 = arith.constant 0 : i32
    %c0_i32_0 = arith.constant 0 : i32
    %c0_i32_1 = arith.constant 0 : i32
    %c0_i32_2 = arith.constant 0 : i32
    return %c0_i32, %c0_i32_0, %c0_i32_1 : i32, i32, i32
  }
  func.func @transform_9(%arg0: i32, %arg1: i32) -> (i32, i32) {
    %c0_i32 = arith.constant 0 : i32
    %c0_i32_0 = arith.constant 0 : i32
    %c0_i32_1 = arith.constant 0 : i32
    return %c0_i32, %c0_i32_0 : i32, i32
  }
  func.func @transform_10(%arg0: i32, %arg1: i32) -> (i32, i32, i32) {
    %c0_i32 = arith.constant 0 : i32
    %c0_i32_0 = arith.constant 0 : i32
    %c0_i32_1 = arith.constant 0 : i32
    %c0_i32_2 = arith.constant 0 : i32
    return %c0_i32, %c0_i32_0, %c0_i32_1 : i32, i32, i32
  }
  func.func @transform_11(%arg0: i32, %arg1: i32) -> (i32, i32) {
    %c0_i32 = arith.constant 0 : i32
    %c0_i32_0 = arith.constant 0 : i32
    %c0_i32_1 = arith.constant 0 : i32
    return %c0_i32, %c0_i32_0 : i32, i32
  }
  func.func @transform_12(%arg0: i32, %arg1: i32) -> (i32, i32, i32) {
    %c0_i32 = arith.constant 0 : i32
    %c0_i32_0 = arith.constant 0 : i32
    return %arg0, %arg1, %c0_i32 : i32, i32, i32
  }
}

</mosaic_0001>

<llo_original>
// kernel: tile.18
$region0: #{tile.18}
  #allocation0 [shape = 's32[1]{0}', space=sflag, size = 0x4, scoped, tag = 'scoped memory for tile.18']
  %s0 = inlined_call_operand.vmem [shape: f32[8], index: 0, kind: input, shape index: {}]
  %s1 = inlined_call_operand.vmem [shape: f32[16,8], index: 1, kind: output, shape index: {}]
  // Predicated region
  $region2: #{tile.18} parent=0 // pred_check
    _
  $region3: #{tile.18} parent=0 // pred_check_branch
    %3 = sbr.rel (0) target = $region5
  $region4: #{tile.18} parent=0 // pred_region
    _
  $region5: #{tile.18} parent=0 // pred_fallthru
    _
  %v4 = vld [vmem:[%s0] ss:$0 sm:$0xff]
  %5 = vst [vmem:[%s1] sm:$0xff] %v4
  %s6 = scalar_lea.vmem %s1, 8
  %7 = vst [vmem:[%s6] sm:$0xff] %v4

// kernel: tile.19
$region0: #{tile.19}
  %s0 = inlined_call_operand.vmem [shape: f32[16,8], index: 0, kind: input, shape index: {}]
  %s1 = inlined_call_operand.vmem [shape: f32[1,128], index: 1, kind: output, shape index: {}]
  $region1: #{tile.19} parent=0
    #allocation0 [shape = 'u8[4096]{0}', space=vmem, size = 0x1000, scoped, tag = 'scoped mem for output reshape']
    %v2 = vld [vmem:[%s0] sm:$0x1]
    %vm3 = vcmask 64512
    %4 = vst.msk [vmem:[#allocation0] sm:$0x1] %vm3, %v2
    %s5 = scalar_lea.vmem %s0, 15
    %v6 = vld [vmem:[%s5] sm:$0x1]
    %7 = vrot.lane.b32.xlu0 %v6, 120
    %v8 = vpop.permute.xlu0 %7
    %vm9 = vcmask 1048512
    %10 = vst.msk [vmem:[#allocation0] sm:$0x1] %vm9, %v8
    %s11 = scalar_lea.vmem %s0, 14
    %v12 = vld [vmem:[%s11] sm:$0x1]
    %13 = vrot.lane.b32.xlu0 %v12, 112
    %v14 = vpop.permute.xlu0 %13
    %vm15 = vcmask 982912
    %16 = vst.msk [vmem:[#allocation0] sm:$0x1] %vm15, %v14
    %s17 = scalar_lea.vmem %s0, 13
    %v18 = vld [vmem:[%s17] sm:$0x1]
    %19 = vrot.lane.b32.xlu0 %v18, 104
    %v20 = vpop.permute.xlu0 %19
    %vm21 = vcmask 917312
    %22 = vst.msk [vmem:[#allocation0] sm:$0x1] %vm21, %v20
    %s23 = scalar_lea.vmem %s0, 12
    %v24 = vld [vmem:[%s23] sm:$0x1]
    %25 = vrot.lane.b32.xlu0 %v24, 96
    %v26 = vpop.permute.xlu0 %25
    %vm27 = vcmask 851712
    %28 = vst.msk [vmem:[#allocation0] sm:$0x1] %vm27, %v26
    %s29 = scalar_lea.vmem %s0, 11
    %v30 = vld [vmem:[%s29] sm:$0x1]
    %31 = vrot.lane.b32.xlu0 %v30, 88
    %v32 = vpop.permute.xlu0 %31
    %vm33 = vcmask 786112
    %34 = vst.msk [vmem:[#allocation0] sm:$0x1] %vm33, %v32
    %s35 = scalar_lea.vmem %s0, 10
    %v36 = vld [vmem:[%s35] sm:$0x1]
    %37 = vrot.lane.b32.xlu0 %v36, 80
    %v38 = vpop.permute.xlu0 %37
    %vm39 = vcmask 720512
    %40 = vst.msk [vmem:[#allocation0] sm:$0x1] %vm39, %v38
    %s41 = scalar_lea.vmem %s0, 9
    %v42 = vld [vmem:[%s41] sm:$0x1]
    %43 = vrot.lane.b32.xlu0 %v42, 72
    %v44 = vpop.permute.xlu0 %43
    %vm45 = vcmask 654912
    %46 = vst.msk [vmem:[#allocation0] sm:$0x1] %vm45, %v44
    %s47 = scalar_lea.vmem %s0, 8
    %v48 = vld [vmem:[%s47] sm:$0x1]
    %49 = vrot.lane.b32.xlu0 %v48, 64
    %v50 = vpop.permute.xlu0 %49
    %vm51 = vcmask 589312
    %52 = vst.msk [vmem:[#allocation0] sm:$0x1] %vm51, %v50
    %s53 = scalar_lea.vmem %s0, 7
    %v54 = vld [vmem:[%s53] sm:$0x1]
    %55 = vrot.lane.b32.xlu0 %v54, 56
    %v56 = vpop.permute.xlu0 %55
    %vm57 = vcmask 523712
    %58 = vst.msk [vmem:[#allocation0] sm:$0x1] %vm57, %v56
    %s59 = scalar_lea.vmem %s0, 6
    %v60 = vld [vmem:[%s59] sm:$0x1]
    %61 = vrot.lane.b32.xlu0 %v60, 48
    %v62 = vpop.permute.xlu0 %61
    %vm63 = vcmask 458112
    %64 = vst.msk [vmem:[#allocation0] sm:$0x1] %vm63, %v62
    %s65 = scalar_lea.vmem %s0, 5
    %v66 = vld [vmem:[%s65] sm:$0x1]
    %67 = vrot.lane.b32.xlu0 %v66, 40
    %v68 = vpop.permute.xlu0 %67
    %vm69 = vcmask 392512
    %70 = vst.msk [vmem:[#allocation0] sm:$0x1] %vm69, %v68
    %s71 = scalar_lea.vmem %s0, 4
    %v72 = vld [vmem:[%s71] sm:$0x1]
    %73 = vrot.lane.b32.xlu0 %v72, 32
    %v74 = vpop.permute.xlu0 %73
    %vm75 = vcmask 326912
    %76 = vst.msk [vmem:[#allocation0] sm:$0x1] %vm75, %v74
    %s77 = scalar_lea.vmem %s0, 3
    %v78 = vld [vmem:[%s77] sm:$0x1]
    %79 = vrot.lane.b32.xlu0 %v78, 24
    %v80 = vpop.permute.xlu0 %79
    %vm81 = vcmask 261312
    %82 = vst.msk [vmem:[#allocation0] sm:$0x1] %vm81, %v80
    %s83 = scalar_lea.vmem %s0, 2
    %v84 = vld [vmem:[%s83] sm:$0x1]
    %85 = vrot.lane.b32.xlu0 %v84, 16
    %v86 = vpop.permute.xlu0 %85
    %vm87 = vcmask 195712
    %88 = vst.msk [vmem:[#allocation0] sm:$0x1] %vm87, %v86
    %s89 = scalar_lea.vmem %s0, 1
    %v90 = vld [vmem:[%s89] sm:$0x1]
    %91 = vrot.lane.b32.xlu0 %v90, 8
    %v92 = vpop.permute.xlu0 %91
    %vm93 = vcmask 130112
    %94 = vst.msk [vmem:[#allocation0] sm:$0x1] %vm93, %v92
    %s96 = sshllo.u32 0, 1
    %v98 = vld [vmem:[#allocation0] sm:%s96]
    %s99 = sshllo.u32 0, 1
    %100 = vst [vmem:[%s1] sm:%s99] %v98

// kernel: decoder_block_forward.1
$region0: #{decoder_block_forward.1}
  #allocation0 [shape = 'u32[]', space=smem, size = 0x4, offset = 0x4, fixed_abs, tag = 'smem constant byte address 0x4 - core index']
  #allocation1 [shape = 'u32[144,128]{1,0:T(1,128)}', space=vmem, size = 0x12000, scoped, tag = 'internal scratch']
  #allocation2 [shape = 'bf16[20,256]{1,0:T(8,128)(2,1)}', space=vmem, size = 0x3000, scoped, tag = 'scratch operand']
  #allocation3 [shape = 'bf16[18,128]{1,0:T(8,128)(2,1)}', space=vmem, size = 0x1800, scoped, tag = 'scratch operand']
  %s0 = inlined_call_operand.vmem [shape: f32[2,16,64], index: 0, kind: input, shape index: {}, may-alias: {0,1,2}]
  %s1 = inlined_call_operand.vmem [shape: f32[2,16,64], index: 1, kind: input, shape index: {}, may-alias: {0,1,2}]
  %s2 = inlined_call_operand.vmem [shape: f32[2,16,64], index: 2, kind: input, shape index: {}, may-alias: {0,1,2}]
  %s3 = inlined_call_operand.vmem [shape: f32[2,16,128], index: 3, kind: input, shape index: {}, may-alias: {3,4,5}]
  %s4 = inlined_call_operand.vmem [shape: f32[2,16,128], index: 4, kind: input, shape index: {}, may-alias: {3,4,5}]
  %s5 = inlined_call_operand.vmem [shape: f32[2,16,128], index: 5, kind: input, shape index: {}, may-alias: {3,4,5}]
  %s6 = inlined_call_operand.vmem [shape: bf16[64,256], index: 6, kind: input, shape index: {}]
  %s7 = inlined_call_operand.vmem [shape: f32[1,128], index: 7, kind: input, shape index: {}]
  %s8 = inlined_call_operand.vmem [shape: bf16[3,256,128], index: 8, kind: input, shape index: {}]
  %s9 = inlined_call_operand.vmem [shape: f32[1,128], index: 9, kind: input, shape index: {}]
  %s10 = inlined_call_operand.vmem [shape: bf16[3,128,128], index: 10, kind: input, shape index: {}]
  %s11 = inlined_call_operand.vmem [shape: f32[1,128], index: 11, kind: input, shape index: {}]
  %s12 = inlined_call_operand.vmem [shape: f32[2,16,128], index: 12, kind: output, shape index: {}]
  %s13 = sld [smem:[#allocation0]]
  $region81: #{decoder_block_forward.1} parent=0
    _
  %s15 = ssub.s32 1, %s13
  %s16 = scalar_select 0, %s15, %s13
  loop: start=0, step=1, limit=4
  $region2: #{decoder_block_forward.1} parent=0 // loop_pre_header
    _
  $region3: #{decoder_block_forward.1} parent=0 // loop_header
    %s18 = sphi 0, %s22
    %p19 = scmp.ge.s32.totalorder %s18, 4
    %s25 = sphi 0, %s37
    %s26 = sphi 0, %s33
    %s27 = sphi 0, %s25
    %s28 = sphi 0, %s26
    %s29 = sphi 0, %s27
    %s30 = sphi 0, %s28
    %s42 = sphi 0, %s44
    %s45 = sphi 0, %s42
    %s46 = sphi 0, %s45
    %s62 = sphi 0, %s46
    %s78 = sphi 0, %s80
    %s81 = sphi 0, %s78
    %s82 = sphi 0, %s81
    %s98 = sphi 0, %s82
    %s114 = sphi 0, %s116
    %s117 = sphi 0, %s114
    %s118 = sphi 0, %s117
    %s134 = sphi 0, %s118
    %s142 = sphi 0, %s144
    %s145 = sphi 0, %s142
    %s146 = sphi 0, %s145
    %s162 = sphi 0, %s146
    %s178 = sphi 0, %s180
    %s181 = sphi 0, %s178
    %s182 = sphi 0, %s181
    %s198 = sphi 0, %s182
    %s214 = sphi 0, %s216
    %s217 = sphi 0, %s214
    %s218 = sphi 0, %s217
    %s234 = sphi 0, %s218
    %s238 = sphi 0, %s238
    %s240 = sphi 0, %s238
    %s241 = sphi 0, %s240
    %s255 = sphi 0, %s241
    %s259 = sphi 0, %s259
    %s261 = sphi 0, %s259
    %s262 = sphi 0, %s261
    %s276 = sphi 0, %s262
    %s280 = sphi 0, %s280
    %s282 = sphi 0, %s280
    %s283 = sphi 0, %s282
    %s297 = sphi 0, %s283
    %s301 = sphi 0, %s301
    %s303 = sphi 0, %s301
    %s304 = sphi 0, %s303
    %s318 = sphi 0, %s304
    %s322 = sphi 0, %s322
    %s324 = sphi 0, %s322
    %s325 = sphi 0, %s324
    %s339 = sphi 0, %s325
    %s343 = sphi 0, %s343
    %s345 = sphi 0, %s343
    %s346 = sphi 0, %s345
    %s360 = sphi 0, %s346
    %s368 = sphi 0, %s370
    %s371 = sphi 0, %s368
    %s372 = sphi 0, %s371
    %s388 = sphi 0, %s372
  $region4: #{decoder_block_forward.1} parent=0 // loop_header_branch
    %21 = sbr.rel (%p19) target = $region8
  $region5: #{decoder_block_forward.1} parent=0 // loop_body
    %s23 = ssub.s32 %s18, 1
    %s24 = ssub.s32 %s18, 2
    %s31 = sadd.s32 1, %s26
    %p32 = scmp.ge.s32.totalorder %s31, 1
    %s33 = scalar_select %p32, 0, %s31
    %s34 = sadd.s32 1, %s25
    %s35 = scalar_select %p32, %s34, %s25
    %p36 = scmp.ge.s32.totalorder %s35, 2
    %s37 = scalar_select %p36, 0, %s35
    %s38 = ssub.s32 %s25, %s37
    %s39 = ssub.s32 %s26, %s33
    %s40 = sor.u32 %s38, %s39
    %p41 = scmp.eq.s32.totalorder %s40, 0
    %s43 = sadd.s32 %s42, 1
    %s44 = scalar_select %p41, %s42, %s43
    %p47 = pneg %p41
    %p48 = scmp.eq.s32.totalorder %s18, 1
    %p49 = por %p47, %p48
    %p50 = scmp.ne.s32.totalorder %s42, %s45
    %p51 = scmp.eq.s32.totalorder %s18, 0
    %p52 = por %p50, %p51
    %p53 = scmp.ne.s32.totalorder %s42, %s45
    %p54 = scmp.eq.s32.totalorder %s23, 1
    %p55 = por %p53, %p54
    %p56 = scmp.ne.s32.totalorder %s45, %s46
    %p57 = scmp.eq.s32.totalorder %s23, 0
    %p58 = por %p56, %p57
    %p59 = scmp.ne.s32.totalorder %s45, %s46
    %p60 = scmp.eq.s32.totalorder %s24, 1
    %p61 = por %p59, %p60
    %p63 = scmp.ne.s32.totalorder %s46, %s62
    %p64 = scmp.eq.s32.totalorder %s24, 0
    %p65 = por %p63, %p64
    %s66 = smul.u32 %s26, 2
    %s67 = ssub.s32 %s66, 1
    %p68 = scmp.gt.s32.totalorder %s67, 0
    %s69 = scalar_select %p68, %s67, 0
    %s70 = smul.u32 %s33, 2
    %s71 = ssub.s32 %s70, 1
    %p72 = scmp.gt.s32.totalorder %s71, 0
    %s73 = scalar_select %p72, %s71, 0
    %s74 = ssub.s32 %s25, %s37
    %s75 = ssub.s32 %s69, %s73
    %s76 = sor.u32 %s74, %s75
    %p77 = scmp.eq.s32.totalorder %s76, 0
    %s79 = sadd.s32 %s78, 1
    %s80 = scalar_select %p77, %s78, %s79
    %p83 = pneg %p77
    %p84 = scmp.eq.s32.totalorder %s18, 1
    %p85 = por %p83, %p84
    %p86 = scmp.ne.s32.totalorder %s78, %s81
    %p87 = scmp.eq.s32.totalorder %s18, 0
    %p88 = por %p86, %p87
    %p89 = scmp.ne.s32.totalorder %s78, %s81
    %p90 = scmp.eq.s32.totalorder %s23, 1
    %p91 = por %p89, %p90
    %p92 = scmp.ne.s32.totalorder %s81, %s82
    %p93 = scmp.eq.s32.totalorder %s23, 0
    %p94 = por %p92, %p93
    %p95 = scmp.ne.s32.totalorder %s81, %s82
    %p96 = scmp.eq.s32.totalorder %s24, 1
    %p97 = por %p95, %p96
    %p99 = scmp.ne.s32.totalorder %s82, %s98
    %p100 = scmp.eq.s32.totalorder %s24, 0
    %p101 = por %p99, %p100
    %s102 = sadd.s32 %s26, 1
    %s103 = smul.u32 %s102, 2
    %p104 = scmp.lt.s32.totalorder %s103, 1
    %s105 = scalar_select %p104, %s103, 1
    %s106 = sadd.s32 %s33, 1
    %s107 = smul.u32 %s106, 2
    %p108 = scmp.lt.s32.totalorder %s107, 1
    %s109 = scalar_select %p108, %s107, 1
    %s110 = ssub.s32 %s25, %s37
    %s111 = ssub.s32 %s105, %s109
    %s112 = sor.u32 %s110, %s111
    %p113 = scmp.eq.s32.totalorder %s112, 0
    %s115 = sadd.s32 %s114, 1
    %s116 = scalar_select %p113, %s114, %s115
    %p119 = pneg %p113
    %p120 = scmp.eq.s32.totalorder %s18, 1
    %p121 = por %p119, %p120
    %p122 = scmp.ne.s32.totalorder %s114, %s117
    %p123 = scmp.eq.s32.totalorder %s18, 0
    %p124 = por %p122, %p123
    %p125 = scmp.ne.s32.totalorder %s114, %s117
    %p126 = scmp.eq.s32.totalorder %s23, 1
    %p127 = por %p125, %p126
    %p128 = scmp.ne.s32.totalorder %s117, %s118
    %p129 = scmp.eq.s32.totalorder %s23, 0
    %p130 = por %p128, %p129
    %p131 = scmp.ne.s32.totalorder %s117, %s118
    %p132 = scmp.eq.s32.totalorder %s24, 1
    %p133 = por %p131, %p132
    %p135 = scmp.ne.s32.totalorder %s118, %s134
    %p136 = scmp.eq.s32.totalorder %s24, 0
    %p137 = por %p135, %p136
    %s138 = ssub.s32 %s25, %s37
    %s139 = ssub.s32 %s26, %s33
    %s140 = sor.u32 %s138, %s139
    %p141 = scmp.eq.s32.totalorder %s140, 0
    %s143 = sadd.s32 %s142, 1
    %s144 = scalar_select %p141, %s142, %s143
    %p147 = pneg %p141
    %p148 = scmp.eq.s32.totalorder %s18, 1
    %p149 = por %p147, %p148
    %p150 = scmp.ne.s32.totalorder %s142, %s145
    %p151 = scmp.eq.s32.totalorder %s18, 0
    %p152 = por %p150, %p151
    %p153 = scmp.ne.s32.totalorder %s142, %s145
    %p154 = scmp.eq.s32.totalorder %s23, 1
    %p155 = por %p153, %p154
    %p156 = scmp.ne.s32.totalorder %s145, %s146
    %p157 = scmp.eq.s32.totalorder %s23, 0
    %p158 = por %p156, %p157
    %p159 = scmp.ne.s32.totalorder %s145, %s146
    %p160 = scmp.eq.s32.totalorder %s24, 1
    %p161 = por %p159, %p160
    %p163 = scmp.ne.s32.totalorder %s146, %s162
    %p164 = scmp.eq.s32.totalorder %s24, 0
    %p165 = por %p163, %p164
    %s166 = smul.u32 %s26, 2
    %s167 = ssub.s32 %s166, 1
    %p168 = scmp.gt.s32.totalorder %s167, 0
    %s169 = scalar_select %p168, %s167, 0
    %s170 = smul.u32 %s33, 2
    %s171 = ssub.s32 %s170, 1
    %p172 = scmp.gt.s32.totalorder %s171, 0
    %s173 = scalar_select %p172, %s171, 0
    %s174 = ssub.s32 %s25, %s37
    %s175 = ssub.s32 %s169, %s173
    %s176 = sor.u32 %s174, %s175
    %p177 = scmp.eq.s32.totalorder %s176, 0
    %s179 = sadd.s32 %s178, 1
    %s180 = scalar_select %p177, %s178, %s179
    %p183 = pneg %p177
    %p184 = scmp.eq.s32.totalorder %s18, 1
    %p185 = por %p183, %p184
    %p186 = scmp.ne.s32.totalorder %s178, %s181
    %p187 = scmp.eq.s32.totalorder %s18, 0
    %p188 = por %p186, %p187
    %p189 = scmp.ne.s32.totalorder %s178, %s181
    %p190 = scmp.eq.s32.totalorder %s23, 1
    %p191 = por %p189, %p190
    %p192 = scmp.ne.s32.totalorder %s181, %s182
    %p193 = scmp.eq.s32.totalorder %s23, 0
    %p194 = por %p192, %p193
    %p195 = scmp.ne.s32.totalorder %s181, %s182
    %p196 = scmp.eq.s32.totalorder %s24, 1
    %p197 = por %p195, %p196
    %p199 = scmp.ne.s32.totalorder %s182, %s198
    %p200 = scmp.eq.s32.totalorder %s24, 0
    %p201 = por %p199, %p200
    %s202 = sadd.s32 %s26, 1
    %s203 = smul.u32 %s202, 2
    %p204 = scmp.lt.s32.totalorder %s203, 1
    %s205 = scalar_select %p204, %s203, 1
    %s206 = sadd.s32 %s33, 1
    %s207 = smul.u32 %s206, 2
    %p208 = scmp.lt.s32.totalorder %s207, 1
    %s209 = scalar_select %p208, %s207, 1
    %s210 = ssub.s32 %s25, %s37
    %s211 = ssub.s32 %s205, %s209
    %s212 = sor.u32 %s210, %s211
    %p213 = scmp.eq.s32.totalorder %s212, 0
    %s215 = sadd.s32 %s214, 1
    %s216 = scalar_select %p213, %s214, %s215
    %p219 = pneg %p213
    %p220 = scmp.eq.s32.totalorder %s18, 1
    %p221 = por %p219, %p220
    %p222 = scmp.ne.s32.totalorder %s214, %s217
    %p223 = scmp.eq.s32.totalorder %s18, 0
    %p224 = por %p222, %p223
    %p225 = scmp.ne.s32.totalorder %s214, %s217
    %p226 = scmp.eq.s32.totalorder %s23, 1
    %p227 = por %p225, %p226
    %p228 = scmp.ne.s32.totalorder %s217, %s218
    %p229 = scmp.eq.s32.totalorder %s23, 0
    %p230 = por %p228, %p229
    %p231 = scmp.ne.s32.totalorder %s217, %s218
    %p232 = scmp.eq.s32.totalorder %s24, 1
    %p233 = por %p231, %p232
    %p235 = scmp.ne.s32.totalorder %s218, %s234
    %p236 = scmp.eq.s32.totalorder %s24, 0
    %p237 = por %p235, %p236
    %s239 = sadd.s32 %s238, 1
    %p242 = scmp.eq.s32.totalorder %s18, 1
    %p243 = scmp.ne.s32.totalorder %s238, %s240
    %p244 = scmp.eq.s32.totalorder %s18, 0
    %p245 = por %p243, %p244
    %p246 = scmp.ne.s32.totalorder %s238, %s240
    %p247 = scmp.eq.s32.totalorder %s23, 1
    %p248 = por %p246, %p247
    %p249 = scmp.ne.s32.totalorder %s240, %s241
    %p250 = scmp.eq.s32.totalorder %s23, 0
    %p251 = por %p249, %p250
    %p252 = scmp.ne.s32.totalorder %s240, %s241
    %p253 = scmp.eq.s32.totalorder %s24, 1
    %p254 = por %p252, %p253
    %p256 = scmp.ne.s32.totalorder %s241, %s255
    %p257 = scmp.eq.s32.totalorder %s24, 0
    %p258 = por %p256, %p257
    %s260 = sadd.s32 %s259, 1
    %p263 = scmp.eq.s32.totalorder %s18, 1
    %p264 = scmp.ne.s32.totalorder %s259, %s261
    %p265 = scmp.eq.s32.totalorder %s18, 0
    %p266 = por %p264, %p265
    %p267 = scmp.ne.s32.totalorder %s259, %s261
    %p268 = scmp.eq.s32.totalorder %s23, 1
    %p269 = por %p267, %p268
    %p270 = scmp.ne.s32.totalorder %s261, %s262
    %p271 = scmp.eq.s32.totalorder %s23, 0
    %p272 = por %p270, %p271
    %p273 = scmp.ne.s32.totalorder %s261, %s262
    %p274 = scmp.eq.s32.totalorder %s24, 1
    %p275 = por %p273, %p274
    %p277 = scmp.ne.s32.totalorder %s262, %s276
    %p278 = scmp.eq.s32.totalorder %s24, 0
    %p279 = por %p277, %p278
    %s281 = sadd.s32 %s280, 1
    %p284 = scmp.eq.s32.totalorder %s18, 1
    %p285 = scmp.ne.s32.totalorder %s280, %s282
    %p286 = scmp.eq.s32.totalorder %s18, 0
    %p287 = por %p285, %p286
    %p288 = scmp.ne.s32.totalorder %s280, %s282
    %p289 = scmp.eq.s32.totalorder %s23, 1
    %p290 = por %p288, %p289
    %p291 = scmp.ne.s32.totalorder %s282, %s283
    %p292 = scmp.eq.s32.totalorder %s23, 0
    %p293 = por %p291, %p292
    %p294 = scmp.ne.s32.totalorder %s282, %s283
    %p295 = scmp.eq.s32.totalorder %s24, 1
    %p296 = por %p294, %p295
    %p298 = scmp.ne.s32.totalorder %s283, %s297
    %p299 = scmp.eq.s32.totalorder %s24, 0
    %p300 = por %p298, %p299
    %s302 = sadd.s32 %s301, 1
    %p305 = scmp.eq.s32.totalorder %s18, 1
    %p306 = scmp.ne.s32.totalorder %s301, %s303
    %p307 = scmp.eq.s32.totalorder %s18, 0
    %p308 = por %p306, %p307
    %p309 = scmp.ne.s32.totalorder %s301, %s303
    %p310 = scmp.eq.s32.totalorder %s23, 1
    %p311 = por %p309, %p310
    %p312 = scmp.ne.s32.totalorder %s303, %s304
    %p313 = scmp.eq.s32.totalorder %s23, 0
    %p314 = por %p312, %p313
    %p315 = scmp.ne.s32.totalorder %s303, %s304
    %p316 = scmp.eq.s32.totalorder %s24, 1
    %p317 = por %p315, %p316
    %p319 = scmp.ne.s32.totalorder %s304, %s318
    %p320 = scmp.eq.s32.totalorder %s24, 0
    %p321 = por %p319, %p320
    %s323 = sadd.s32 %s322, 1
    %p326 = scmp.eq.s32.totalorder %s18, 1
    %p327 = scmp.ne.s32.totalorder %s322, %s324
    %p328 = scmp.eq.s32.totalorder %s18, 0
    %p329 = por %p327, %p328
    %p330 = scmp.ne.s32.totalorder %s322, %s324
    %p331 = scmp.eq.s32.totalorder %s23, 1
    %p332 = por %p330, %p331
    %p333 = scmp.ne.s32.totalorder %s324, %s325
    %p334 = scmp.eq.s32.totalorder %s23, 0
    %p335 = por %p333, %p334
    %p336 = scmp.ne.s32.totalorder %s324, %s325
    %p337 = scmp.eq.s32.totalorder %s24, 1
    %p338 = por %p336, %p337
    %p340 = scmp.ne.s32.totalorder %s325, %s339
    %p341 = scmp.eq.s32.totalorder %s24, 0
    %p342 = por %p340, %p341
    %s344 = sadd.s32 %s343, 1
    %p347 = scmp.eq.s32.totalorder %s18, 1
    %p348 = scmp.ne.s32.totalorder %s343, %s345
    %p349 = scmp.eq.s32.totalorder %s18, 0
    %p350 = por %p348, %p349
    %p351 = scmp.ne.s32.totalorder %s343, %s345
    %p352 = scmp.eq.s32.totalorder %s23, 1
    %p353 = por %p351, %p352
    %p354 = scmp.ne.s32.totalorder %s345, %s346
    %p355 = scmp.eq.s32.totalorder %s23, 0
    %p356 = por %p354, %p355
    %p357 = scmp.ne.s32.totalorder %s345, %s346
    %p358 = scmp.eq.s32.totalorder %s24, 1
    %p359 = por %p357, %p358
    %p361 = scmp.ne.s32.totalorder %s346, %s360
    %p362 = scmp.eq.s32.totalorder %s24, 0
    %p363 = por %p361, %p362
    %s364 = ssub.s32 %s25, %s37
    %s365 = ssub.s32 %s26, %s33
    %s366 = sor.u32 %s364, %s365
    %p367 = scmp.eq.s32.totalorder %s366, 0
    %s369 = sadd.s32 %s368, 1
    %s370 = scalar_select %p367, %s368, %s369
    %p373 = pneg %p367
    %p374 = scmp.eq.s32.totalorder %s18, 1
    %p375 = por %p373, %p374
    %p376 = scmp.ne.s32.totalorder %s368, %s371
    %p377 = scmp.eq.s32.totalorder %s18, 0
    %p378 = por %p376, %p377
    %p379 = scmp.ne.s32.totalorder %s368, %s371
    %p380 = scmp.eq.s32.totalorder %s23, 1
    %p381 = por %p379, %p380
    %p382 = scmp.ne.s32.totalorder %s371, %s372
    %p383 = scmp.eq.s32.totalorder %s23, 0
    %p384 = por %p382, %p383
    %p385 = scmp.ne.s32.totalorder %s371, %s372
    %p386 = scmp.eq.s32.totalorder %s24, 1
    %p387 = por %p385, %p386
    %p389 = scmp.ne.s32.totalorder %s372, %s388
    %p390 = scmp.eq.s32.totalorder %s24, 0
    %p391 = por %p389, %p390
    %p392 = scmp.le.s32.totalorder 1, %s18
    %p393 = scmp.lt.s32.totalorder %s18, 3
    %p394 = pnand %p392, %p393
    %p395 = pneg %p394
    // Predicated region
    $region9: #{decoder_block_forward.1} parent=5 // pred_check
      _
    $region10: #{decoder_block_forward.1} parent=5 // pred_check_branch
      %397 = sbr.rel (%p394) target = $region12
    $region11: #{decoder_block_forward.1} parent=5 // pred_region
      %s398 = ssub.s32 %s18, 1
      // Predicated region
      $region13: #{decoder_block_forward.1} parent=11 // pred_check
        %p399 = pneg %p251
      $region14: #{decoder_block_forward.1} parent=11 // pred_check_branch
        %401 = sbr.rel (%p399) target = $region16
      $region15: #{decoder_block_forward.1} parent=11 // pred_region
        _
      $region16: #{decoder_block_forward.1} parent=11 // pred_fallthru
        _
      // Predicated region
      $region17: #{decoder_block_forward.1} parent=11 // pred_check
        %p402 = pneg %p272
      $region18: #{decoder_block_forward.1} parent=11 // pred_check_branch
        %404 = sbr.rel (%p402) target = $region20
      $region19: #{decoder_block_forward.1} parent=11 // pred_region
        _
      $region20: #{decoder_block_forward.1} parent=11 // pred_fallthru
        _
      // Predicated region
      $region21: #{decoder_block_forward.1} parent=11 // pred_check
        %p405 = pneg %p293
      $region22: #{decoder_block_forward.1} parent=11 // pred_check_branch
        %407 = sbr.rel (%p405) target = $region24
      $region23: #{decoder_block_forward.1} parent=11 // pred_region
        _
      $region24: #{decoder_block_forward.1} parent=11 // pred_fallthru
        _
      // Predicated region
      $region25: #{decoder_block_forward.1} parent=11 // pred_check
        %p408 = pneg %p314
      $region26: #{decoder_block_forward.1} parent=11 // pred_check_branch
        %410 = sbr.rel (%p408) target = $region28
      $region27: #{decoder_block_forward.1} parent=11 // pred_region
        _
      $region28: #{decoder_block_forward.1} parent=11 // pred_fallthru
        _
      // Predicated region
      $region29: #{decoder_block_forward.1} parent=11 // pred_check
        %p411 = pneg %p335
      $region30: #{decoder_block_forward.1} parent=11 // pred_check_branch
        %413 = sbr.rel (%p411) target = $region32
      $region31: #{decoder_block_forward.1} parent=11 // pred_region
        _
      $region32: #{decoder_block_forward.1} parent=11 // pred_fallthru
        _
      // Predicated region
      $region33: #{decoder_block_forward.1} parent=11 // pred_check
        %p414 = pneg %p356
      $region34: #{decoder_block_forward.1} parent=11 // pred_check_branch
        %416 = sbr.rel (%p414) target = $region36
      $region35: #{decoder_block_forward.1} parent=11 // pred_region
        _
      $region36: #{decoder_block_forward.1} parent=11 // pred_fallthru
        _
    $region12: #{decoder_block_forward.1} parent=5 // pred_fallthru
      _
    %p417 = scmp.lt.s32.totalorder %s18, 2
    // Predicated region
    $region37: #{decoder_block_forward.1} parent=5 // pred_check
      %p418 = pneg %p417
    $region38: #{decoder_block_forward.1} parent=5 // pred_check_branch
      %420 = sbr.rel (%p418) target = $region40
    $region39: #{decoder_block_forward.1} parent=5 // pred_region
      // Predicated region
      $region41: #{decoder_block_forward.1} parent=39 // pred_check
        %p421 = pneg %p52
      $region42: #{decoder_block_forward.1} parent=39 // pred_check_branch
        %423 = sbr.rel (%p421) target = $region44
      $region43: #{decoder_block_forward.1} parent=39 // pred_region
        %s424 = smul.u32 2, %s26
        %p425 = scmp.lt.s32.totalorder %s25, 1
        %s426 = scalar_select %p425, %s25, 1
        %p427 = scmp.lt.s32.totalorder %s424, 1
        %s428 = scalar_select %p427, %s424, 1
        %s429 = smul.addr %s426, 2
        %s430 = sadd.s32 %s428, %s429
        %s431 = smul.addr %s430, 8
        %s432 = scalar_lea.vmem %s0, %s431
        %s433 = smul.u32 2, %s26
      $region44: #{decoder_block_forward.1} parent=39 // pred_fallthru
        _
      // Predicated region
      $region45: #{decoder_block_forward.1} parent=39 // pred_check
        %p434 = pneg %p88
      $region46: #{decoder_block_forward.1} parent=39 // pred_check_branch
        %436 = sbr.rel (%p434) target = $region48
      $region47: #{decoder_block_forward.1} parent=39 // pred_region
        %s437 = smul.u32 %s26, 2
        %s438 = ssub.s32 %s437, 1
        %p439 = scmp.gt.s32.totalorder %s438, 0
        %s440 = scalar_select %p439, %s438, 0
        %p441 = scmp.lt.s32.totalorder %s25, 1
        %s442 = scalar_select %p441, %s25, 1
        %p443 = scmp.lt.s32.totalorder %s440, 1
        %s444 = scalar_select %p443, %s440, 1
        %s445 = smul.addr %s442, 2
        %s446 = sadd.s32 %s444, %s445
        %s447 = smul.addr %s446, 8
        %s448 = scalar_lea.vmem %s1, %s447
        %s449 = smul.u32 %s26, 2
        %s450 = ssub.s32 %s449, 1
        %p451 = scmp.gt.s32.totalorder %s450, 0
        %s452 = scalar_select %p451, %s450, 0
      $region48: #{decoder_block_forward.1} parent=39 // pred_fallthru
        _
      // Predicated region
      $region49: #{decoder_block_forward.1} parent=39 // pred_check
        %p453 = pneg %p124
      $region50: #{decoder_block_forward.1} parent=39 // pred_check_branch
        %455 = sbr.rel (%p453) target = $region52
      $region51: #{decoder_block_forward.1} parent=39 // pred_region
        %s456 = sadd.s32 %s26, 1
        %s457 = smul.u32 %s456, 2
        %p458 = scmp.lt.s32.totalorder %s457, 1
        %s459 = scalar_select %p458, %s457, 1
        %p460 = scmp.lt.s32.totalorder %s25, 1
        %s461 = scalar_select %p460, %s25, 1
        %p462 = scmp.lt.s32.totalorder %s459, 1
        %s463 = scalar_select %p462, %s459, 1
        %s464 = smul.addr %s461, 2
        %s465 = sadd.s32 %s463, %s464
        %s466 = smul.addr %s465, 8
        %s467 = scalar_lea.vmem %s2, %s466
        %s468 = sadd.s32 %s26, 1
        %s469 = smul.u32 %s468, 2
        %p470 = scmp.lt.s32.totalorder %s469, 1
        %s471 = scalar_select %p470, %s469, 1
      $region52: #{decoder_block_forward.1} parent=39 // pred_fallthru
        _
      // Predicated region
      $region53: #{decoder_block_forward.1} parent=39 // pred_check
        %p472 = pneg %p152
      $region54: #{decoder_block_forward.1} parent=39 // pred_check_branch
        %474 = sbr.rel (%p472) target = $region56
      $region55: #{decoder_block_forward.1} parent=39 // pred_region
        %s475 = smul.u32 2, %s26
        %p476 = scmp.lt.s32.totalorder %s25, 1
        %s477 = scalar_select %p476, %s25, 1
        %p478 = scmp.lt.s32.totalorder %s475, 1
        %s479 = scalar_select %p478, %s475, 1
        %s480 = smul.addr %s477, 2
        %s481 = sadd.s32 %s479, %s480
        %s482 = smul.addr %s481, 8
        %s483 = scalar_lea.vmem %s3, %s482
        %s484 = smul.u32 2, %s26
      $region56: #{decoder_block_forward.1} parent=39 // pred_fallthru
        _
      // Predicated region
      $region57: #{decoder_block_forward.1} parent=39 // pred_check
        %p485 = pneg %p188
      $region58: #{decoder_block_forward.1} parent=39 // pred_check_branch
        %487 = sbr.rel (%p485) target = $region60
      $region59: #{decoder_block_forward.1} parent=39 // pred_region
        %s488 = smul.u32 %s26, 2
        %s489 = ssub.s32 %s488, 1
        %p490 = scmp.gt.s32.totalorder %s489, 0
        %s491 = scalar_select %p490, %s489, 0
        %p492 = scmp.lt.s32.totalorder %s25, 1
        %s493 = scalar_select %p492, %s25, 1
        %p494 = scmp.lt.s32.totalorder %s491, 1
        %s495 = scalar_select %p494, %s491, 1
        %s496 = smul.addr %s493, 2
        %s497 = sadd.s32 %s495, %s496
        %s498 = smul.addr %s497, 8
        %s499 = scalar_lea.vmem %s4, %s498
        %s500 = smul.u32 %s26, 2
        %s501 = ssub.s32 %s500, 1
        %p502 = scmp.gt.s32.totalorder %s501, 0
        %s503 = scalar_select %p502, %s501, 0
      $region60: #{decoder_block_forward.1} parent=39 // pred_fallthru
        _
      // Predicated region
      $region61: #{decoder_block_forward.1} parent=39 // pred_check
        %p504 = pneg %p224
      $region62: #{decoder_block_forward.1} parent=39 // pred_check_branch
        %506 = sbr.rel (%p504) target = $region64
      $region63: #{decoder_block_forward.1} parent=39 // pred_region
        %s507 = sadd.s32 %s26, 1
        %s508 = smul.u32 %s507, 2
        %p509 = scmp.lt.s32.totalorder %s508, 1
        %s510 = scalar_select %p509, %s508, 1
        %p511 = scmp.lt.s32.totalorder %s25, 1
        %s512 = scalar_select %p511, %s25, 1
        %p513 = scmp.lt.s32.totalorder %s510, 1
        %s514 = scalar_select %p513, %s510, 1
        %s515 = smul.addr %s512, 2
        %s516 = sadd.s32 %s514, %s515
        %s517 = smul.addr %s516, 8
        %s518 = scalar_lea.vmem %s5, %s517
        %s519 = sadd.s32 %s26, 1
        %s520 = smul.u32 %s519, 2
        %p521 = scmp.lt.s32.totalorder %s520, 1
        %s522 = scalar_select %p521, %s520, 1
      $region64: #{decoder_block_forward.1} parent=39 // pred_fallthru
        _
    $region40: #{decoder_block_forward.1} parent=5 // pred_fallthru
      _
    %p523 = scmp.le.s32.totalorder 1, %s18
    %p524 = scmp.lt.s32.totalorder %s18, 3
    %p525 = pnand %p523, %p524
    %p526 = pneg %p525
    // Predicated region
    $region65: #{decoder_block_forward.1} parent=5 // pred_check
      _
    $region66: #{decoder_block_forward.1} parent=5 // pred_check_branch
      %528 = sbr.rel (%p525) target = $region68
    $region67: #{decoder_block_forward.1} parent=5 // pred_region
      %s529 = ssub.s32 %s18, 1
      %s530 = smul.u32 2, %s28
      %p531 = scmp.lt.s32.totalorder %s27, 1
      %s532 = scalar_select %p531, %s27, 1
      %p533 = scmp.lt.s32.totalorder %s530, 1
      %s534 = scalar_select %p533, %s530, 1
      %s535 = smul.addr %s532, 2
      %s536 = sadd.s32 %s534, %s535
      %s537 = smul.addr %s536, 8
      %s538 = scalar_lea.vmem %s0, %s537
      %p539 = pneg %p58
      %p540 = pneg %p55
      %s541 = smul.u32 %s28, 2
      %s542 = ssub.s32 %s541, 1
      %p543 = scmp.gt.s32.totalorder %s542, 0
      %s544 = scalar_select %p543, %s542, 0
      %p545 = scmp.lt.s32.totalorder %s27, 1
      %s546 = scalar_select %p545, %s27, 1
      %p547 = scmp.lt.s32.totalorder %s544, 1
      %s548 = scalar_select %p547, %s544, 1
      %s549 = smul.addr %s546, 2
      %s550 = sadd.s32 %s548, %s549
      %s551 = smul.addr %s550, 8
      %s552 = scalar_lea.vmem %s1, %s551
      %p553 = pneg %p94
      %p554 = pneg %p91
      %s555 = sadd.s32 %s28, 1
      %s556 = smul.u32 %s555, 2
      %p557 = scmp.lt.s32.totalorder %s556, 1
      %s558 = scalar_select %p557, %s556, 1
      %p559 = scmp.lt.s32.totalorder %s27, 1
      %s560 = scalar_select %p559, %s27, 1
      %p561 = scmp.lt.s32.totalorder %s558, 1
      %s562 = scalar_select %p561, %s558, 1
      %s563 = smul.addr %s560, 2
      %s564 = sadd.s32 %s562, %s563
      %s565 = smul.addr %s564, 8
      %s566 = scalar_lea.vmem %s2, %s565
      %p567 = pneg %p130
      %p568 = pneg %p127
      %s569 = smul.u32 2, %s28
      %p570 = scmp.lt.s32.totalorder %s27, 1
      %s571 = scalar_select %p570, %s27, 1
      %p572 = scmp.lt.s32.totalorder %s569, 1
      %s573 = scalar_select %p572, %s569, 1
      %s574 = smul.addr %s571, 2
      %s575 = sadd.s32 %s573, %s574
      %s576 = smul.addr %s575, 8
      %s577 = scalar_lea.vmem %s3, %s576
      %p578 = pneg %p158
      %p579 = pneg %p155
      %s580 = smul.u32 %s28, 2
      %s581 = ssub.s32 %s580, 1
      %p582 = scmp.gt.s32.totalorder %s581, 0
      %s583 = scalar_select %p582, %s581, 0
      %p584 = scmp.lt.s32.totalorder %s27, 1
      %s585 = scalar_select %p584, %s27, 1
      %p586 = scmp.lt.s32.totalorder %s583, 1
      %s587 = scalar_select %p586, %s583, 1
      %s588 = smul.addr %s585, 2
      %s589 = sadd.s32 %s587, %s588
      %s590 = smul.addr %s589, 8
      %s591 = scalar_lea.vmem %s4, %s590
      %p592 = pneg %p194
      %p593 = pneg %p191
      %s594 = sadd.s32 %s28, 1
      %s595 = smul.u32 %s594, 2
      %p596 = scmp.lt.s32.totalorder %s595, 1
      %s597 = scalar_select %p596, %s595, 1
      %p598 = scmp.lt.s32.totalorder %s27, 1
      %s599 = scalar_select %p598, %s27, 1
      %p600 = scmp.lt.s32.totalorder %s597, 1
      %s601 = scalar_select %p600, %s597, 1
      %s602 = smul.addr %s599, 2
      %s603 = sadd.s32 %s601, %s602
      %s604 = smul.addr %s603, 8
      %s605 = scalar_lea.vmem %s5, %s604
      %p606 = pneg %p230
      %p607 = pneg %p227
      %p608 = pneg %p251
      %p609 = pneg %p248
      %p610 = pneg %p272
      %p611 = pneg %p269
      %p612 = pneg %p293
      %p613 = pneg %p290
      %p614 = pneg %p314
      %p615 = pneg %p311
      %p616 = pneg %p335
      %p617 = pneg %p332
      %p618 = pneg %p356
      %p619 = pneg %p353
      %p620 = pneg %p384
      %p621 = pneg %p381
      %s622 = smul.u32 2, %s28
      %p623 = scmp.lt.s32.totalorder %s27, 1
      %s624 = scalar_select %p623, %s27, 1
      %p625 = scmp.lt.s32.totalorder %s622, 1
      %s626 = scalar_select %p625, %s622, 1
      %s627 = smul.addr %s624, 2
      %s628 = sadd.s32 %s626, %s627
      %s629 = smul.addr %s628, 8
      %s630 = scalar_lea.vmem %s12, %s629
      %s631 = smul.u32 2, %s28
      %p632 = scmp.lt.s32.totalorder %s27, 1
      %s633 = scalar_select %p632, %s27, 1
      %p634 = scmp.lt.s32.totalorder %s631, 1
      %s635 = scalar_select %p634, %s631, 1
      %s636 = smul.addr %s633, 2
      %s637 = sadd.s32 %s635, %s636
      %s638 = smul.addr %s637, 8
      %s639 = scalar_lea.vmem %s0, %s638
      %s640 = smul.u32 2, %s28
      %s641 = smul.u32 %s28, 2
      %s642 = ssub.s32 %s641, 1
      %p643 = scmp.gt.s32.totalorder %s642, 0
      %s644 = scalar_select %p643, %s642, 0
      %p645 = scmp.lt.s32.totalorder %s27, 1
      %s646 = scalar_select %p645, %s27, 1
      %p647 = scmp.lt.s32.totalorder %s644, 1
      %s648 = scalar_select %p647, %s644, 1
      %s649 = smul.addr %s646, 2
      %s650 = sadd.s32 %s648, %s649
      %s651 = smul.addr %s650, 8
      %s652 = scalar_lea.vmem %s1, %s651
      %s653 = smul.u32 %s28, 2
      %s654 = ssub.s32 %s653, 1
      %p655 = scmp.gt.s32.totalorder %s654, 0
      %s656 = scalar_select %p655, %s654, 0
      %s657 = sadd.s32 %s28, 1
      %s658 = smul.u32 %s657, 2
      %p659 = scmp.lt.s32.totalorder %s658, 1
      %s660 = scalar_select %p659, %s658, 1
      %p661 = scmp.lt.s32.totalorder %s27, 1
      %s662 = scalar_select %p661, %s27, 1
      %p663 = scmp.lt.s32.totalorder %s660, 1
      %s664 = scalar_select %p663, %s660, 1
      %s665 = smul.addr %s662, 2
      %s666 = sadd.s32 %s664, %s665
      %s667 = smul.addr %s666, 8
      %s668 = scalar_lea.vmem %s2, %s667
      %s669 = sadd.s32 %s28, 1
      %s670 = smul.u32 %s669, 2
      %p671 = scmp.lt.s32.totalorder %s670, 1
      %s672 = scalar_select %p671, %s670, 1
      %s673 = smul.u32 2, %s28
      %p674 = scmp.lt.s32.totalorder %s27, 1
      %s675 = scalar_select %p674, %s27, 1
      %p676 = scmp.lt.s32.totalorder %s673, 1
      %s677 = scalar_select %p676, %s673, 1
      %s678 = smul.addr %s675, 2
      %s679 = sadd.s32 %s677, %s678
      %s680 = smul.addr %s679, 8
      %s681 = scalar_lea.vmem %s3, %s680
      %s682 = smul.u32 2, %s28
      %s683 = smul.u32 %s28, 2
      %s684 = ssub.s32 %s683, 1
      %p685 = scmp.gt.s32.totalorder %s684, 0
      %s686 = scalar_select %p685, %s684, 0
      %p687 = scmp.lt.s32.totalorder %s27, 1
      %s688 = scalar_select %p687, %s27, 1
      %p689 = scmp.lt.s32.totalorder %s686, 1
      %s690 = scalar_select %p689, %s686, 1
      %s691 = smul.addr %s688, 2
      %s692 = sadd.s32 %s690, %s691
      %s693 = smul.addr %s692, 8
      %s694 = scalar_lea.vmem %s4, %s693
      %s695 = smul.u32 %s28, 2
      %s696 = ssub.s32 %s695, 1
      %p697 = scmp.gt.s32.totalorder %s696, 0
      %s698 = scalar_select %p697, %s696, 0
      %s699 = sadd.s32 %s28, 1
      %s700 = smul.u32 %s699, 2
      %p701 = scmp.lt.s32.totalorder %s700, 1
      %s702 = scalar_select %p701, %s700, 1
      %p703 = scmp.lt.s32.totalorder %s27, 1
      %s704 = scalar_select %p703, %s27, 1
      %p705 = scmp.lt.s32.totalorder %s702, 1
      %s706 = scalar_select %p705, %s702, 1
      %s707 = smul.addr %s704, 2
      %s708 = sadd.s32 %s706, %s707
      %s709 = smul.addr %s708, 8
      %s710 = scalar_lea.vmem %s5, %s709
      %s711 = sadd.s32 %s28, 1
      %s712 = smul.u32 %s711, 2
      %p713 = scmp.lt.s32.totalorder %s712, 1
      %s714 = scalar_select %p713, %s712, 1
      %s715 = smul.u32 2, %s28
      %p716 = scmp.lt.s32.totalorder %s27, 1
      %s717 = scalar_select %p716, %s27, 1
      %p718 = scmp.lt.s32.totalorder %s715, 1
      %s719 = scalar_select %p718, %s715, 1
      %s720 = smul.addr %s717, 2
      %s721 = sadd.s32 %s719, %s720
      %s722 = smul.addr %s721, 8
      %s723 = scalar_lea.vmem %s12, %s722
      %s724 = smul.u32 2, %s28
      %v726 = vld [vmem:[%s6] sm:$0xff]
      %v727 = vld [vmem:[%s6 + $0x8] sm:$0xff]
      %v728 = vld [vmem:[%s6 + $0x10] sm:$0xff]
      %v729 = vld [vmem:[%s6 + $0x18] sm:$0xff]
      %v730 = vld [vmem:[%s6 + $0x20] sm:$0xff]
      %v731 = vld [vmem:[%s6 + $0x28] sm:$0xff]
      %v732 = vld [vmem:[%s6 + $0x30] sm:$0xff]
      %v733 = vld [vmem:[%s6 + $0x38] sm:$0xff]
      %v734 = vld [vmem:[%s7] sm:$0x1]
      %p735 = scmp.gt.s32.totalorder %s28, 0
      %p736 = scmp.lt.s32.totalorder %s28, 0
      %v737 = vld [vmem:[%s652 + $0x6] sm:$0x3]
      %v738 = vpack.c.bf16 %v737, %v737
      %v747 = vunpack.c.l.b16 %v726
      %v748 = vunpack.c.h.b16 %v726
      %v749 = vunpack.c.l.b16 %v727
      %v750 = vunpack.c.h.b16 %v727
      %v751 = vunpack.c.l.b16 %v728
      %v752 = vunpack.c.h.b16 %v728
      %v753 = vunpack.c.l.b16 %v729
      %v754 = vunpack.c.h.b16 %v729
      %v755 = vunpack.c.l.b16 %v730
      %v756 = vunpack.c.h.b16 %v730
      %v757 = vunpack.c.l.b16 %v731
      %v758 = vunpack.c.h.b16 %v731
      %v759 = vunpack.c.l.b16 %v732
      %v760 = vunpack.c.h.b16 %v732
      %v761 = vunpack.c.l.b16 %v733
      %v762 = vunpack.c.h.b16 %v733
      %v763 = vpack.c.b16 %v749, %v747
      %v764 = vpack.c.b16 %v750, %v748
      %v765 = vpack.c.b16 %v753, %v751
      %v766 = vpack.c.b16 %v754, %v752
      %v767 = vpack.c.b16 %v757, %v755
      %v768 = vpack.c.b16 %v758, %v756
      %v769 = vpack.c.b16 %v761, %v759
      %v770 = vpack.c.b16 %v762, %v760
      %vm779 = vcmask 523264
      %v781 = vsel %vm779, %v738, 0
      %783 = vmatprep.subr.bf16.mxu0 %v764
      %784 = vmatpush1.bf16.msra.mxu0 %v763
      %785 = vmatprep.subr.bf16.mxu0 %v766
      %786 = vmatpush1.bf16.msra.mxu0 %v765
      %787 = vmatprep.subr.bf16.mxu0 %v768
      %788 = vmatpush1.bf16.msra.mxu0 %v767
      %789 = vmatprep.subr.bf16.mxu0 %v770
      %790 = vmatpush1.bf16.msra.mxu0 %v769
      %791 = vmatprep.subr.bf16.mxu0 0
      %792 = vmatpush1.bf16.msra.mxu0 0
      %793 = vmatprep.subr.bf16.mxu0 0
      %794 = vmatpush1.bf16.msra.mxu0 0
      %795 = vmatprep.subr.bf16.mxu0 0
      %796 = vmatpush1.bf16.msra.mxu0 0
      %797 = vmatprep.subr.bf16.mxu0 0
      %798 = vmatpush1.bf16.msra.mxu0 0
      %799 = vmatprep.subr.bf16.mxu0 0
      %800 = vmatpush1.bf16.msra.mxu0 0
      %801 = vmatprep.subr.bf16.mxu0 0
      %802 = vmatpush1.bf16.msra.mxu0 0
      %803 = vmatprep.subr.bf16.mxu0 0
      %804 = vmatpush1.bf16.msra.mxu0 0
      %805 = vmatprep.subr.bf16.mxu0 0
      %806 = vmatpush1.bf16.msra.mxu0 0
      %807 = vmatprep.subr.bf16.mxu0 0
      %808 = vmatpush1.bf16.msra.mxu0 0
      %809 = vmatprep.subr.bf16.mxu0 0
      %810 = vmatpush1.bf16.msra.mxu0 0
      %811 = vmatprep.subr.bf16.mxu0 0
      %812 = vmatpush1.bf16.msra.mxu0 0
      %813 = vmatprep.subr.bf16.mxu0 0
      %814 = vmatpush1.bf16.msra.mxu0 0
      %815 = vmatprep.mubr.bf16.mxu0 0
      %816 = vmatmul.mubr.bf16.gmra.mrb[0].mxu0 %v781
      %v817 = vpop.f32.mrb[0].mxu0
      %v818 = vadd.f32 0.0, %v817
      %v819 = vpop.f32.mrb[0].mxu0
      %v820 = vadd.f32 0.0, %v819
      %v821 = vpop.f32.mrb[0].mxu0
      %v822 = vpop.f32.mrb[0].mxu0
      %823 = vdwg.mxu0
      %v824 = vlaneseq
      %v825 = vshrl.u32 %v824, 7
      %vm826 = vcmp.lt.s32.totalorder %v825, 0
      %v827 = vsub.s32 0, %v825
      %v828 = vsel %vm826, %v827, %v825
      %v829 = vshrl.u32 %v828, 1
      %v830 = vand.u32 %v828, 1
      %v831 = vsub.s32 0, %v830
      %v832 = vsel %vm826, %v831, %v830
      %vm833 = vcmp.ne.s32.totalorder %v832, 0
      %vm834 = vcmp.lt.s32.totalorder %v832, 0
      %vm835 = vmand %vm834, %vm833
      %v836 = vadd.s32 %v832, 2
      %v837 = vsel %vm835, %v836, %v832
      %vm838 = vcmp.eq.s32.totalorder %v837, 0
      %v839 = vsel %vm838, 1, 0
      %vm840 = vcmp.eq.s32.totalorder %v839, 1
      %v841 = vsel %vm840, %v818, %v820
      %v843 = vlaneseq
      %v844 = vshrl.u32 %v843, 7
      %v845 = vsub.s32 0, %v844
      %v846 = vrot.slane %v734, %v845
      %v848 = vadd.f32 %v841, %v846
      %s849 = scalar_select %p735, 1, 0
      %v850 = vstv %s849
      %vm851 = vcmp.eq.s32.totalorder %v850, 1
      %v852 = vsel %vm851, %v848, 0.0
      %v853 = vpack.c.bf16 %v852, %v852
      %854 = vst [vmem:[#allocation2] sm:$0x1] %v853
      %v855 = vld [vmem:[%s639] sm:$0xff]
      %v856 = vld [vmem:[%s639 + $0x8] sm:$0xff]
      %v857 = vpack.c.bf16 %v856, %v855
      %v859 = vsel %vm779, %v857, 0
      %861 = vmatprep.subr.bf16.mxu0 %v764
      %862 = vmatpush1.bf16.msra.mxu0 %v763
      %863 = vmatprep.subr.bf16.mxu0 %v766
      %864 = vmatpush1.bf16.msra.mxu0 %v765
      %865 = vmatprep.subr.bf16.mxu0 %v768
      %866 = vmatpush1.bf16.msra.mxu0 %v767
      %867 = vmatprep.subr.bf16.mxu0 %v770
      %868 = vmatpush1.bf16.msra.mxu0 %v769
      %869 = vmatprep.subr.bf16.mxu0 0
      %870 = vmatpush1.bf16.msra.mxu0 0
      %871 = vmatprep.subr.bf16.mxu0 0
      %872 = vmatpush1.bf16.msra.mxu0 0
      %873 = vmatprep.subr.bf16.mxu0 0
      %874 = vmatpush1.bf16.msra.mxu0 0
      %875 = vmatprep.subr.bf16.mxu0 0
      %876 = vmatpush1.bf16.msra.mxu0 0
      %877 = vmatprep.subr.bf16.mxu0 0
      %878 = vmatpush1.bf16.msra.mxu0 0
      %879 = vmatprep.subr.bf16.mxu0 0
      %880 = vmatpush1.bf16.msra.mxu0 0
      %881 = vmatprep.subr.bf16.mxu0 0
      %882 = vmatpush1.bf16.msra.mxu0 0
      %883 = vmatprep.subr.bf16.mxu0 0
      %884 = vmatpush1.bf16.msra.mxu0 0
      %885 = vmatprep.subr.bf16.mxu0 0
      %886 = vmatpush1.bf16.msra.mxu0 0
      %887 = vmatprep.subr.bf16.mxu0 0
      %888 = vmatpush1.bf16.msra.mxu0 0
      %889 = vmatprep.subr.bf16.mxu0 0
      %890 = vmatpush1.bf16.msra.mxu0 0
      %891 = vmatprep.subr.bf16.mxu0 0
      %892 = vmatpush1.bf16.msra.mxu0 0
      %893 = vmatprep.mubr.bf16.mxu0 0
      %894 = vmatmul.mubr.bf16.gmra.mrb[0].mxu0 %v859
      %v895 = vpop.f32.mrb[0].mxu0
      %v896 = vadd.f32 0.0, %v895
      %v897 = vpop.f32.mrb[0].mxu0
      %v898 = vadd.f32 0.0, %v897
      %v899 = vpop.f32.mrb[0].mxu0
      %v900 = vadd.f32 0.0, %v899
      %v901 = vpop.f32.mrb[0].mxu0
      %v902 = vadd.f32 0.0, %v901
      %903 = vdwg.mxu0
      %v904 = vadd.s32 %v825, 8
      %vm905 = vcmp.lt.s32.totalorder %v904, 0
      %v906 = vsub.s32 0, %v904
      %v907 = vsel %vm905, %v906, %v904
      %v908 = vshrl.u32 %v907, 1
      %v909 = vand.u32 %v907, 1
      %v910 = vsub.s32 0, %v909
      %v911 = vsel %vm905, %v910, %v909
      %vm912 = vcmp.ne.s32.totalorder %v911, 0
      %vm913 = vcmp.lt.s32.totalorder %v911, 0
      %vm914 = vmand %vm913, %vm912
      %v915 = vadd.s32 %v911, 2
      %v916 = vsel %vm914, %v915, %v911
      %vm917 = vcmp.eq.s32.totalorder %v916, 0
      %v918 = vsel %vm917, 1, 0
      %vm919 = vcmp.eq.s32.totalorder %v918, 1
      %v920 = vsel %vm840, %v896, %v898
      %v921 = vsel %vm919, %v900, %v902
      %v922 = vadd.f32 %v920, %v846
      %v923 = vadd.f32 %v921, %v846
      %v924 = vpack.c.bf16 %v923, %v922
      %v926 = vunpack.c.l.b16 %v924
      %v927 = vunpack.c.h.b16 %v924
      %v928 = vpack.c.b16 %v926, %v926
      %v929 = vpack.c.b16 %v927, %v927
      %vm930 = vcmask 1040384
      %vm931 = vcmask 1044484
      %vm932 = vmor %vm930, %vm931
      %v933 = vrot.slane %v928, 7
      %v934 = vrot.slane %v933, 4
      %v935 = vrot.slane %v929, 7
      %v936 = vsel %vm932, %v934, %v935
      %v937 = vrot.slane %v935, 4
      %941 = vst [vmem:[#allocation2] sm:$0xe] %v933
      %942 = vst [vmem:[#allocation2 + $0x8] sm:$0xf] %v936
      %943 = vst [vmem:[#allocation2 + $0x10] sm:$0x1] %v937
      %v944 = vld [vmem:[%s668] sm:$0x3]
      %v945 = vpack.c.bf16 %v944, %v944
      %v947 = vsel %vm779, %v945, 0
      %949 = vmatprep.subr.bf16.mxu0 %v764
      %950 = vmatpush1.bf16.msra.mxu0 %v763
      %951 = vmatprep.subr.bf16.mxu0 %v766
      %952 = vmatpush1.bf16.msra.mxu0 %v765
      %953 = vmatprep.subr.bf16.mxu0 %v768
      %954 = vmatpush1.bf16.msra.mxu0 %v767
      %955 = vmatprep.subr.bf16.mxu0 %v770
      %956 = vmatpush1.bf16.msra.mxu0 %v769
      %957 = vmatprep.subr.bf16.mxu0 0
      %958 = vmatpush1.bf16.msra.mxu0 0
      %959 = vmatprep.subr.bf16.mxu0 0
      %960 = vmatpush1.bf16.msra.mxu0 0
      %961 = vmatprep.subr.bf16.mxu0 0
      %962 = vmatpush1.bf16.msra.mxu0 0
      %963 = vmatprep.subr.bf16.mxu0 0
      %964 = vmatpush1.bf16.msra.mxu0 0
      %965 = vmatprep.subr.bf16.mxu0 0
      %966 = vmatpush1.bf16.msra.mxu0 0
      %967 = vmatprep.subr.bf16.mxu0 0
      %968 = vmatpush1.bf16.msra.mxu0 0
      %969 = vmatprep.subr.bf16.mxu0 0
      %970 = vmatpush1.bf16.msra.mxu0 0
      %971 = vmatprep.subr.bf16.mxu0 0
      %972 = vmatpush1.bf16.msra.mxu0 0
      %973 = vmatprep.subr.bf16.mxu0 0
      %974 = vmatpush1.bf16.msra.mxu0 0
      %975 = vmatprep.subr.bf16.mxu0 0
      %976 = vmatpush1.bf16.msra.mxu0 0
      %977 = vmatprep.subr.bf16.mxu0 0
      %978 = vmatpush1.bf16.msra.mxu0 0
      %979 = vmatprep.subr.bf16.mxu0 0
      %980 = vmatpush1.bf16.msra.mxu0 0
      %981 = vmatprep.mubr.bf16.mxu0 0
      %982 = vmatmul.mubr.bf16.gmra.mrb[0].mxu0 %v947
      %v983 = vpop.f32.mrb[0].mxu0
      %v984 = vadd.f32 0.0, %v983
      %v985 = vpop.f32.mrb[0].mxu0
      %v986 = vadd.f32 0.0, %v985
      %v987 = vpop.f32.mrb[0].mxu0
      %v988 = vpop.f32.mrb[0].mxu0
      %989 = vdwg.mxu0
      %v990 = vsel %vm840, %v984, %v986
      %v991 = vadd.f32 %v990, %v846
      %s992 = scalar_select %p736, 1, 0
      %v993 = vstv %s992
      %vm994 = vcmp.eq.s32.totalorder %v993, 1
      %v995 = vsel %vm994, %v991, 0.0
      %v996 = vpack.c.bf16 %v995, %v995
      %v998 = vunpack.c.l.b16 %v996
      %v999 = vpack.c.b16 %v998, %v998
      %v1000 = vrot.slane %v999, 7
      %1002 = vst [vmem:[#allocation2 + $0x10] sm:$0x2] %v1000
      %v1003 = vld [vmem:[%s694 + $0x6] sm:$0x3]
      %v1004 = vsel %vm851, %v1003, 0.0
      %v1005 = vpack.c.bf16 %v1004, %v1004
      %1006 = vst [vmem:[#allocation2 + $0x4] sm:$0x1] %v1005
      %v1007 = vld [vmem:[%s681] sm:$0xff]
      %v1008 = vld [vmem:[%s681 + $0x8] sm:$0xff]
      %v1009 = vpack.c.bf16 %v1008, %v1007
      %v1011 = vunpack.c.l.b16 %v1009
      %v1012 = vunpack.c.h.b16 %v1009
      %v1013 = vpack.c.b16 %v1011, %v1011
      %v1014 = vpack.c.b16 %v1012, %v1012
      %v1015 = vrot.slane %v1013, 7
      %v1016 = vrot.slane %v1015, 4
      %v1017 = vrot.slane %v1014, 7
      %v1018 = vsel %vm932, %v1016, %v1017
      %v1019 = vrot.slane %v1017, 4
      %1023 = vst [vmem:[#allocation2 + $0x4] sm:$0xe] %v1015
      %1024 = vst [vmem:[#allocation2 + $0xc] sm:$0xf] %v1018
      %1025 = vst [vmem:[#allocation2 + $0x14] sm:$0x1] %v1019
      %v1026 = vld [vmem:[%s710] sm:$0x3]
      %v1027 = vsel %vm994, %v1026, 0.0
      %v1028 = vpack.c.bf16 %v1027, %v1027
      %v1030 = vunpack.c.l.b16 %v1028
      %v1031 = vpack.c.b16 %v1030, %v1030
      %v1032 = vrot.slane %v1031, 7
      %1034 = vst [vmem:[#allocation2 + $0x14] sm:$0x2] %v1032
      %v1035 = vld [vmem:[#allocation2] sm:$0xff]
      %v1036 = vld [vmem:[#allocation2 + $0x8] sm:$0xff]
      %v1037 = vld [vmem:[#allocation2 + $0x10] sm:$0x11]
      %v1038 = vld [vmem:[%s8] sm:$0xf]
      %v1039 = vld [vmem:[%s8 + $0x4] sm:$0xf]
      %v1040 = vld [vmem:[%s8 + $0x8] sm:$0xf]
      %v1041 = vld [vmem:[%s8 + $0xc] sm:$0xf]
      %v1042 = vld [vmem:[%s8 + $0x10] sm:$0xf]
      %v1043 = vld [vmem:[%s8 + $0x14] sm:$0xf]
      %v1044 = vld [vmem:[%s8 + $0x18] sm:$0xf]
      %v1045 = vld [vmem:[%s8 + $0x1c] sm:$0xf]
      %v1046 = vld [vmem:[%s8 + $0x20] sm:$0xf]
      %v1047 = vld [vmem:[%s8 + $0x24] sm:$0xf]
      %v1048 = vld [vmem:[%s8 + $0x28] sm:$0xf]
      %v1049 = vld [vmem:[%s8 + $0x2c] sm:$0xf]
      %v1050 = vld [vmem:[%s8 + $0x30] sm:$0xf]
      %v1051 = vld [vmem:[%s8 + $0x34] sm:$0xf]
      %v1052 = vld [vmem:[%s8 + $0x38] sm:$0xf]
      %v1053 = vld [vmem:[%s8 + $0x3c] sm:$0xf]
      %v1054 = vld [vmem:[%s8 + $0x40] sm:$0xf]
      %v1055 = vld [vmem:[%s8 + $0x44] sm:$0xf]
      %v1056 = vld [vmem:[%s8 + $0x48] sm:$0xf]
      %v1057 = vld [vmem:[%s8 + $0x4c] sm:$0xf]
      %v1058 = vld [vmem:[%s8 + $0x50] sm:$0xf]
      %v1059 = vld [vmem:[%s8 + $0x54] sm:$0xf]
      %v1060 = vld [vmem:[%s8 + $0x58] sm:$0xf]
      %v1061 = vld [vmem:[%s8 + $0x5c] sm:$0xf]
      %v1062 = vld [vmem:[%s8 + $0x60] sm:$0xf]
      %v1063 = vld [vmem:[%s8 + $0x64] sm:$0xf]
      %v1064 = vld [vmem:[%s8 + $0x68] sm:$0xf]
      %v1065 = vld [vmem:[%s8 + $0x6c] sm:$0xf]
      %v1066 = vld [vmem:[%s8 + $0x70] sm:$0xf]
      %v1067 = vld [vmem:[%s8 + $0x74] sm:$0xf]
      %v1068 = vld [vmem:[%s8 + $0x78] sm:$0xf]
      %v1069 = vld [vmem:[%s8 + $0x7c] sm:$0xf]
      %v1070 = vld [vmem:[#allocation2 + $0x10] sm:$0x33]
      %s1071 = scalar_lea.vmem %s8, 128
      %v1072 = vld [vmem:[%s1071] sm:$0xf]
      %v1073 = vld [vmem:[%s1071 + $0x4] sm:$0xf]
      %v1074 = vld [vmem:[%s1071 + $0x8] sm:$0xf]
      %v1075 = vld [vmem:[%s1071 + $0xc] sm:$0xf]
      %v1076 = vld [vmem:[%s1071 + $0x10] sm:$0xf]
      %v1077 = vld [vmem:[%s1071 + $0x14] sm:$0xf]
      %v1078 = vld [vmem:[%s1071 + $0x18] sm:$0xf]
      %v1079 = vld [vmem:[%s1071 + $0x1c] sm:$0xf]
      %v1080 = vld [vmem:[%s1071 + $0x20] sm:$0xf]
      %v1081 = vld [vmem:[%s1071 + $0x24] sm:$0xf]
      %v1082 = vld [vmem:[%s1071 + $0x28] sm:$0xf]
      %v1083 = vld [vmem:[%s1071 + $0x2c] sm:$0xf]
      %v1084 = vld [vmem:[%s1071 + $0x30] sm:$0xf]
      %v1085 = vld [vmem:[%s1071 + $0x34] sm:$0xf]
      %v1086 = vld [vmem:[%s1071 + $0x38] sm:$0xf]
      %v1087 = vld [vmem:[%s1071 + $0x3c] sm:$0xf]
      %v1088 = vld [vmem:[%s1071 + $0x40] sm:$0xf]
      %v1089 = vld [vmem:[%s1071 + $0x44] sm:$0xf]
      %v1090 = vld [vmem:[%s1071 + $0x48] sm:$0xf]
      %v1091 = vld [vmem:[%s1071 + $0x4c] sm:$0xf]
      %v1092 = vld [vmem:[%s1071 + $0x50] sm:$0xf]
      %v1093 = vld [vmem:[%s1071 + $0x54] sm:$0xf]
      %v1094 = vld [vmem:[%s1071 + $0x58] sm:$0xf]
      %v1095 = vld [vmem:[%s1071 + $0x5c] sm:$0xf]
      %v1096 = vld [vmem:[%s1071 + $0x60] sm:$0xf]
      %v1097 = vld [vmem:[%s1071 + $0x64] sm:$0xf]
      %v1098 = vld [vmem:[%s1071 + $0x68] sm:$0xf]
      %v1099 = vld [vmem:[%s1071 + $0x6c] sm:$0xf]
      %v1100 = vld [vmem:[%s1071 + $0x70] sm:$0xf]
      %v1101 = vld [vmem:[%s1071 + $0x74] sm:$0xf]
      %v1102 = vld [vmem:[%s1071 + $0x78] sm:$0xf]
      %v1103 = vld [vmem:[%s1071 + $0x7c] sm:$0xf]
      %v1107 = vunpack.c.l.b16 %v1035
      %v1108 = vunpack.c.h.b16 %v1035
      %v1109 = vunpack.c.l.b16 %v1036
      %v1110 = vunpack.c.h.b16 %v1036
      %v1111 = vunpack.c.l.b16 %v1070
      %v1112 = vunpack.c.h.b16 %v1070
      %v1113 = vpack.c.b16 %v1109, %v1107
      %v1114 = vpack.c.b16 %v1110, %v1108
      %v1115 = vpack.c.b16 %v1111, %v1111
      %v1116 = vpack.c.b16 %v1112, %v1112
      %vm1117 = vsmask.f32 7424
      %v1119 = vshrl.u32 %v1113, 16
      %v1121 = vshll.u32 %v1113, 16
      %v1123 = vrot.slane %v1121, 1
      %v1124 = vor.u32 %v1119, %v1123
      %v1126 = vshll.u32 %v1115, 16
      %v1128 = vrot.slane %v1126, 1
      %v1129 = vsel %vm1117, %v1124, %v1128
      %v1131 = vshrl.u32 %v1114, 16
      %v1133 = vshll.u32 %v1114, 16
      %v1135 = vrot.slane %v1133, 1
      %v1136 = vor.u32 %v1131, %v1135
      %v1138 = vshll.u32 %v1116, 16
      %v1140 = vrot.slane %v1138, 1
      %v1141 = vsel %vm1117, %v1136, %v1140
      %v1142 = vshrl.u32 %v1115, 16
      %v1144 = vor.u32 %v1142, %v1128
      %v1145 = vshrl.u32 %v1116, 16
      %v1147 = vor.u32 %v1145, %v1140
      %v1184 = vunpack.c.l.b16 %v1072
      %v1185 = vunpack.c.l.b16 %v1073
      %v1186 = vunpack.c.l.b16 %v1074
      %v1187 = vunpack.c.l.b16 %v1075
      %v1188 = vunpack.c.l.b16 %v1076
      %v1189 = vunpack.c.l.b16 %v1077
      %v1190 = vunpack.c.l.b16 %v1078
      %v1191 = vunpack.c.l.b16 %v1079
      %v1192 = vunpack.c.l.b16 %v1080
      %v1193 = vunpack.c.l.b16 %v1081
      %v1194 = vunpack.c.l.b16 %v1082
      %v1195 = vunpack.c.l.b16 %v1083
      %v1196 = vunpack.c.l.b16 %v1084
      %v1197 = vunpack.c.l.b16 %v1085
      %v1198 = vunpack.c.l.b16 %v1086
      %v1199 = vunpack.c.l.b16 %v1087
      %v1200 = vunpack.c.l.b16 %v1088
      %v1201 = vunpack.c.l.b16 %v1089
      %v1202 = vunpack.c.l.b16 %v1090
      %v1203 = vunpack.c.l.b16 %v1091
      %v1204 = vunpack.c.l.b16 %v1092
      %v1205 = vunpack.c.l.b16 %v1093
      %v1206 = vunpack.c.l.b16 %v1094
      %v1207 = vunpack.c.l.b16 %v1095
      %v1208 = vunpack.c.l.b16 %v1096
      %v1209 = vunpack.c.l.b16 %v1097
      %v1210 = vunpack.c.l.b16 %v1098
      %v1211 = vunpack.c.l.b16 %v1099
      %v1212 = vunpack.c.l.b16 %v1100
      %v1213 = vunpack.c.l.b16 %v1101
      %v1214 = vunpack.c.l.b16 %v1102
      %v1215 = vunpack.c.l.b16 %v1103
      %v1216 = vpack.c.b16 %v1185, %v1184
      %v1217 = vpack.c.b16 %v1187, %v1186
      %v1218 = vpack.c.b16 %v1189, %v1188
      %v1219 = vpack.c.b16 %v1191, %v1190
      %v1220 = vpack.c.b16 %v1193, %v1192
      %v1221 = vpack.c.b16 %v1195, %v1194
      %v1222 = vpack.c.b16 %v1197, %v1196
      %v1223 = vpack.c.b16 %v1199, %v1198
      %v1224 = vpack.c.b16 %v1201, %v1200
      %v1225 = vpack.c.b16 %v1203, %v1202
      %v1226 = vpack.c.b16 %v1205, %v1204
      %v1227 = vpack.c.b16 %v1207, %v1206
      %v1228 = vpack.c.b16 %v1209, %v1208
      %v1229 = vpack.c.b16 %v1211, %v1210
      %v1230 = vpack.c.b16 %v1213, %v1212
      %v1231 = vpack.c.b16 %v1215, %v1214
      %1248 = vmatprep.subr.bf16.mxu0 0
      %1249 = vmatpush1.bf16.msra.mxu0 %v1216
      %1250 = vmatprep.subr.bf16.mxu0 0
      %1251 = vmatpush1.bf16.msra.mxu0 %v1217
      %1252 = vmatprep.subr.bf16.mxu0 0
      %1253 = vmatpush1.bf16.msra.mxu0 %v1218
      %1254 = vmatprep.subr.bf16.mxu0 0
      %1255 = vmatpush1.bf16.msra.mxu0 %v1219
      %1256 = vmatprep.subr.bf16.mxu0 0
      %1257 = vmatpush1.bf16.msra.mxu0 %v1220
      %1258 = vmatprep.subr.bf16.mxu0 0
      %1259 = vmatpush1.bf16.msra.mxu0 %v1221
      %1260 = vmatprep.subr.bf16.mxu0 0
      %1261 = vmatpush1.bf16.msra.mxu0 %v1222
      %1262 = vmatprep.subr.bf16.mxu0 0
      %1263 = vmatpush1.bf16.msra.mxu0 %v1223
      %1264 = vmatprep.subr.bf16.mxu0 0
      %1265 = vmatpush1.bf16.msra.mxu0 %v1224
      %1266 = vmatprep.subr.bf16.mxu0 0
      %1267 = vmatpush1.bf16.msra.mxu0 %v1225
      %1268 = vmatprep.subr.bf16.mxu0 0
      %1269 = vmatpush1.bf16.msra.mxu0 %v1226
      %1270 = vmatprep.subr.bf16.mxu0 0
      %1271 = vmatpush1.bf16.msra.mxu0 %v1227
      %1272 = vmatprep.subr.bf16.mxu0 0
      %1273 = vmatpush1.bf16.msra.mxu0 %v1228
      %1274 = vmatprep.subr.bf16.mxu0 0
      %1275 = vmatpush1.bf16.msra.mxu0 %v1229
      %1276 = vmatprep.subr.bf16.mxu0 0
      %1277 = vmatpush1.bf16.msra.mxu0 %v1230
      %1278 = vmatprep.subr.bf16.mxu0 0
      %1279 = vmatpush1.bf16.msra.mxu0 %v1231
      %1280 = vmatprep.mubr.bf16.mxu0 %v1141
      %1281 = vmatmul.mubr.bf16.gmra.mrb[0].mxu0 %v1129
      %v1282 = vpop.f32.mrb[0].mxu0
      %v1283 = vadd.f32 0.0, %v1282
      %v1284 = vpop.f32.mrb[0].mxu0
      %v1285 = vpop.f32.mrb[0].mxu0
      %v1286 = vadd.f32 0.0, %v1285
      %v1287 = vpop.f32.mrb[0].mxu0
      %1288 = vmatprep.mubr.bf16.mxu0 %v1147
      %1289 = vmatmul.mubr.bf16.gmra.mrb[0].mxu0 %v1144
      %v1290 = vpop.f32.mrb[0].mxu0
      %v1291 = vadd.f32 0.0, %v1290
      %v1292 = vpop.f32.mrb[0].mxu0
      %v1293 = vpop.f32.mrb[0].mxu0
      %v1294 = vpop.f32.mrb[0].mxu0
      %1295 = vdwg.mxu0
      %v1297 = vunpack.c.l.b16 %v1037
      %v1298 = vunpack.c.h.b16 %v1037
      %v1299 = vpack.c.b16 %v1297, %v1297
      %v1300 = vpack.c.b16 %v1298, %v1298
      %v1337 = vunpack.c.l.b16 %v1038
      %v1338 = vunpack.c.l.b16 %v1039
      %v1339 = vunpack.c.l.b16 %v1040
      %v1340 = vunpack.c.l.b16 %v1041
      %v1341 = vunpack.c.l.b16 %v1042
      %v1342 = vunpack.c.l.b16 %v1043
      %v1343 = vunpack.c.l.b16 %v1044
      %v1344 = vunpack.c.l.b16 %v1045
      %v1345 = vunpack.c.l.b16 %v1046
      %v1346 = vunpack.c.l.b16 %v1047
      %v1347 = vunpack.c.l.b16 %v1048
      %v1348 = vunpack.c.l.b16 %v1049
      %v1349 = vunpack.c.l.b16 %v1050
      %v1350 = vunpack.c.l.b16 %v1051
      %v1351 = vunpack.c.l.b16 %v1052
      %v1352 = vunpack.c.l.b16 %v1053
      %v1353 = vunpack.c.l.b16 %v1054
      %v1354 = vunpack.c.l.b16 %v1055
      %v1355 = vunpack.c.l.b16 %v1056
      %v1356 = vunpack.c.l.b16 %v1057
      %v1357 = vunpack.c.l.b16 %v1058
      %v1358 = vunpack.c.l.b16 %v1059
      %v1359 = vunpack.c.l.b16 %v1060
      %v1360 = vunpack.c.l.b16 %v1061
      %v1361 = vunpack.c.l.b16 %v1062
      %v1362 = vunpack.c.l.b16 %v1063
      %v1363 = vunpack.c.l.b16 %v1064
      %v1364 = vunpack.c.l.b16 %v1065
      %v1365 = vunpack.c.l.b16 %v1066
      %v1366 = vunpack.c.l.b16 %v1067
      %v1367 = vunpack.c.l.b16 %v1068
      %v1368 = vunpack.c.l.b16 %v1069
      %v1369 = vpack.c.b16 %v1338, %v1337
      %v1370 = vpack.c.b16 %v1340, %v1339
      %v1371 = vpack.c.b16 %v1342, %v1341
      %v1372 = vpack.c.b16 %v1344, %v1343
      %v1373 = vpack.c.b16 %v1346, %v1345
      %v1374 = vpack.c.b16 %v1348, %v1347
      %v1375 = vpack.c.b16 %v1350, %v1349
      %v1376 = vpack.c.b16 %v1352, %v1351
      %v1377 = vpack.c.b16 %v1354, %v1353
      %v1378 = vpack.c.b16 %v1356, %v1355
      %v1379 = vpack.c.b16 %v1358, %v1357
      %v1380 = vpack.c.b16 %v1360, %v1359
      %v1381 = vpack.c.b16 %v1362, %v1361
      %v1382 = vpack.c.b16 %v1364, %v1363
      %v1383 = vpack.c.b16 %v1366, %v1365
      %v1384 = vpack.c.b16 %v1368, %v1367
      %1401 = vmatprep.subr.bf16.mxu0 0
      %1402 = vmatpush1.bf16.msra.mxu0 %v1369
      %1403 = vmatprep.subr.bf16.mxu0 0
      %1404 = vmatpush1.bf16.msra.mxu0 %v1370
      %1405 = vmatprep.subr.bf16.mxu0 0
      %1406 = vmatpush1.bf16.msra.mxu0 %v1371
      %1407 = vmatprep.subr.bf16.mxu0 0
      %1408 = vmatpush1.bf16.msra.mxu0 %v1372
      %1409 = vmatprep.subr.bf16.mxu0 0
      %1410 = vmatpush1.bf16.msra.mxu0 %v1373
      %1411 = vmatprep.subr.bf16.mxu0 0
      %1412 = vmatpush1.bf16.msra.mxu0 %v1374
      %1413 = vmatprep.subr.bf16.mxu0 0
      %1414 = vmatpush1.bf16.msra.mxu0 %v1375
      %1415 = vmatprep.subr.bf16.mxu0 0
      %1416 = vmatpush1.bf16.msra.mxu0 %v1376
      %1417 = vmatprep.subr.bf16.mxu0 0
      %1418 = vmatpush1.bf16.msra.mxu0 %v1377
      %1419 = vmatprep.subr.bf16.mxu0 0
      %1420 = vmatpush1.bf16.msra.mxu0 %v1378
      %1421 = vmatprep.subr.bf16.mxu0 0
      %1422 = vmatpush1.bf16.msra.mxu0 %v1379
      %1423 = vmatprep.subr.bf16.mxu0 0
      %1424 = vmatpush1.bf16.msra.mxu0 %v1380
      %1425 = vmatprep.subr.bf16.mxu0 0
      %1426 = vmatpush1.bf16.msra.mxu0 %v1381
      %1427 = vmatprep.subr.bf16.mxu0 0
      %1428 = vmatpush1.bf16.msra.mxu0 %v1382
      %1429 = vmatprep.subr.bf16.mxu0 0
      %1430 = vmatpush1.bf16.msra.mxu0 %v1383
      %1431 = vmatprep.subr.bf16.mxu0 0
      %1432 = vmatpush1.bf16.msra.mxu0 %v1384
      %1433 = vmatprep.mubr.bf16.mxu0 %v1114
      %1434 = vmatmul.mubr.bf16.gmra.mrb[0].mxu0 %v1113
      %v1435 = vpop.f32.mrb[0].mxu0
      %v1436 = vadd.f32 %v1283, %v1435
      %v1437 = vpop.f32.mrb[0].mxu0
      %v1438 = vpop.f32.mrb[0].mxu0
      %v1439 = vadd.f32 %v1286, %v1438
      %v1440 = vpop.f32.mrb[0].mxu0
      %1441 = vmatprep.mubr.bf16.mxu0 %v1300
      %1442 = vmatmul.mubr.bf16.gmra.mrb[0].mxu0 %v1299
      %v1443 = vpop.f32.mrb[0].mxu0
      %v1444 = vadd.f32 %v1291, %v1443
      %v1445 = vpop.f32.mrb[0].mxu0
      %v1446 = vpop.f32.mrb[0].mxu0
      %v1447 = vpop.f32.mrb[0].mxu0
      %1448 = vdwg.mxu0
      %v1449 = vld [vmem:[#allocation2] sm:$0xee]
      %s1450 = scalar_lea.vmem %s8, 256
      %v1451 = vld [vmem:[%s1450] sm:$0xf]
      %v1452 = vld [vmem:[%s1450 + $0x4] sm:$0xf]
      %v1453 = vld [vmem:[%s1450 + $0x8] sm:$0xf]
      %v1454 = vld [vmem:[%s1450 + $0xc] sm:$0xf]
      %v1455 = vld [vmem:[%s1450 + $0x10] sm:$0xf]
      %v1456 = vld [vmem:[%s1450 + $0x14] sm:$0xf]
      %v1457 = vld [vmem:[%s1450 + $0x18] sm:$0xf]
      %v1458 = vld [vmem:[%s1450 + $0x1c] sm:$0xf]
      %v1459 = vld [vmem:[%s1450 + $0x20] sm:$0xf]
      %v1460 = vld [vmem:[%s1450 + $0x24] sm:$0xf]
      %v1461 = vld [vmem:[%s1450 + $0x28] sm:$0xf]
      %v1462 = vld [vmem:[%s1450 + $0x2c] sm:$0xf]
      %v1463 = vld [vmem:[%s1450 + $0x30] sm:$0xf]
      %v1464 = vld [vmem:[%s1450 + $0x34] sm:$0xf]
      %v1465 = vld [vmem:[%s1450 + $0x38] sm:$0xf]
      %v1466 = vld [vmem:[%s1450 + $0x3c] sm:$0xf]
      %v1467 = vld [vmem:[%s1450 + $0x40] sm:$0xf]
      %v1468 = vld [vmem:[%s1450 + $0x44] sm:$0xf]
      %v1469 = vld [vmem:[%s1450 + $0x48] sm:$0xf]
      %v1470 = vld [vmem:[%s1450 + $0x4c] sm:$0xf]
      %v1471 = vld [vmem:[%s1450 + $0x50] sm:$0xf]
      %v1472 = vld [vmem:[%s1450 + $0x54] sm:$0xf]
      %v1473 = vld [vmem:[%s1450 + $0x58] sm:$0xf]
      %v1474 = vld [vmem:[%s1450 + $0x5c] sm:$0xf]
      %v1475 = vld [vmem:[%s1450 + $0x60] sm:$0xf]
      %v1476 = vld [vmem:[%s1450 + $0x64] sm:$0xf]
      %v1477 = vld [vmem:[%s1450 + $0x68] sm:$0xf]
      %v1478 = vld [vmem:[%s1450 + $0x6c] sm:$0xf]
      %v1479 = vld [vmem:[%s1450 + $0x70] sm:$0xf]
      %v1480 = vld [vmem:[%s1450 + $0x74] sm:$0xf]
      %v1481 = vld [vmem:[%s1450 + $0x78] sm:$0xf]
      %v1482 = vld [vmem:[%s1450 + $0x7c] sm:$0xf]
      %v1484 = vunpack.c.l.b16 %v1449
      %v1485 = vunpack.c.h.b16 %v1449
      %v1486 = vpack.c.b16 %v1109, %v1484
      %v1487 = vpack.c.b16 %v1110, %v1485
      %vm1488 = vcmask 1046528
      %v1489 = vrot.slane %v1486, 1
      %v1490 = vrot.slane %v1115, 1
      %v1491 = vsel %vm1488, %v1489, %v1490
      %v1492 = vrot.slane %v1487, 1
      %v1493 = vrot.slane %v1116, 1
      %v1494 = vsel %vm1488, %v1492, %v1493
      %v1531 = vunpack.c.l.b16 %v1451
      %v1532 = vunpack.c.l.b16 %v1452
      %v1533 = vunpack.c.l.b16 %v1453
      %v1534 = vunpack.c.l.b16 %v1454
      %v1535 = vunpack.c.l.b16 %v1455
      %v1536 = vunpack.c.l.b16 %v1456
      %v1537 = vunpack.c.l.b16 %v1457
      %v1538 = vunpack.c.l.b16 %v1458
      %v1539 = vunpack.c.l.b16 %v1459
      %v1540 = vunpack.c.l.b16 %v1460
      %v1541 = vunpack.c.l.b16 %v1461
      %v1542 = vunpack.c.l.b16 %v1462
      %v1543 = vunpack.c.l.b16 %v1463
      %v1544 = vunpack.c.l.b16 %v1464
      %v1545 = vunpack.c.l.b16 %v1465
      %v1546 = vunpack.c.l.b16 %v1466
      %v1547 = vunpack.c.l.b16 %v1467
      %v1548 = vunpack.c.l.b16 %v1468
      %v1549 = vunpack.c.l.b16 %v1469
      %v1550 = vunpack.c.l.b16 %v1470
      %v1551 = vunpack.c.l.b16 %v1471
      %v1552 = vunpack.c.l.b16 %v1472
      %v1553 = vunpack.c.l.b16 %v1473
      %v1554 = vunpack.c.l.b16 %v1474
      %v1555 = vunpack.c.l.b16 %v1475
      %v1556 = vunpack.c.l.b16 %v1476
      %v1557 = vunpack.c.l.b16 %v1477
      %v1558 = vunpack.c.l.b16 %v1478
      %v1559 = vunpack.c.l.b16 %v1479
      %v1560 = vunpack.c.l.b16 %v1480
      %v1561 = vunpack.c.l.b16 %v1481
      %v1562 = vunpack.c.l.b16 %v1482
      %v1563 = vpack.c.b16 %v1532, %v1531
      %v1564 = vpack.c.b16 %v1534, %v1533
      %v1565 = vpack.c.b16 %v1536, %v1535
      %v1566 = vpack.c.b16 %v1538, %v1537
      %v1567 = vpack.c.b16 %v1540, %v1539
      %v1568 = vpack.c.b16 %v1542, %v1541
      %v1569 = vpack.c.b16 %v1544, %v1543
      %v1570 = vpack.c.b16 %v1546, %v1545
      %v1571 = vpack.c.b16 %v1548, %v1547
      %v1572 = vpack.c.b16 %v1550, %v1549
      %v1573 = vpack.c.b16 %v1552, %v1551
      %v1574 = vpack.c.b16 %v1554, %v1553
      %v1575 = vpack.c.b16 %v1556, %v1555
      %v1576 = vpack.c.b16 %v1558, %v1557
      %v1577 = vpack.c.b16 %v1560, %v1559
      %v1578 = vpack.c.b16 %v1562, %v1561
      %1595 = vmatprep.subr.bf16.mxu0 0
      %1596 = vmatpush1.bf16.msra.mxu0 %v1563
      %1597 = vmatprep.subr.bf16.mxu0 0
      %1598 = vmatpush1.bf16.msra.mxu0 %v1564
      %1599 = vmatprep.subr.bf16.mxu0 0
      %1600 = vmatpush1.bf16.msra.mxu0 %v1565
      %1601 = vmatprep.subr.bf16.mxu0 0
      %1602 = vmatpush1.bf16.msra.mxu0 %v1566
      %1603 = vmatprep.subr.bf16.mxu0 0
      %1604 = vmatpush1.bf16.msra.mxu0 %v1567
      %1605 = vmatprep.subr.bf16.mxu0 0
      %1606 = vmatpush1.bf16.msra.mxu0 %v1568
      %1607 = vmatprep.subr.bf16.mxu0 0
      %1608 = vmatpush1.bf16.msra.mxu0 %v1569
      %1609 = vmatprep.subr.bf16.mxu0 0
      %1610 = vmatpush1.bf16.msra.mxu0 %v1570
      %1611 = vmatprep.subr.bf16.mxu0 0
      %1612 = vmatpush1.bf16.msra.mxu0 %v1571
      %1613 = vmatprep.subr.bf16.mxu0 0
      %1614 = vmatpush1.bf16.msra.mxu0 %v1572
      %1615 = vmatprep.subr.bf16.mxu0 0
      %1616 = vmatpush1.bf16.msra.mxu0 %v1573
      %1617 = vmatprep.subr.bf16.mxu0 0
      %1618 = vmatpush1.bf16.msra.mxu0 %v1574
      %1619 = vmatprep.subr.bf16.mxu0 0
      %1620 = vmatpush1.bf16.msra.mxu0 %v1575
      %1621 = vmatprep.subr.bf16.mxu0 0
      %1622 = vmatpush1.bf16.msra.mxu0 %v1576
      %1623 = vmatprep.subr.bf16.mxu0 0
      %1624 = vmatpush1.bf16.msra.mxu0 %v1577
      %1625 = vmatprep.subr.bf16.mxu0 0
      %1626 = vmatpush1.bf16.msra.mxu0 %v1578
      %1627 = vmatprep.mubr.bf16.mxu0 %v1494
      %1628 = vmatmul.mubr.bf16.gmra.mrb[0].mxu0 %v1491
      %v1629 = vpop.f32.mrb[0].mxu0
      %v1630 = vadd.f32 0.0, %v1629
      %v1631 = vpop.f32.mrb[0].mxu0
      %v1632 = vpop.f32.mrb[0].mxu0
      %v1633 = vadd.f32 0.0, %v1632
      %v1634 = vpop.f32.mrb[0].mxu0
      %1635 = vmatprep.mubr.bf16.mxu0 %v1493
      %1636 = vmatmul.mubr.bf16.gmra.mrb[0].mxu0 %v1490
      %v1637 = vpop.f32.mrb[0].mxu0
      %v1638 = vadd.f32 0.0, %v1637
      %v1639 = vpop.f32.mrb[0].mxu0
      %v1640 = vpop.f32.mrb[0].mxu0
      %v1641 = vpop.f32.mrb[0].mxu0
      %1642 = vdwg.mxu0
      %v1643 = vadd.f32 %v1436, %v1630
      %v1644 = vadd.f32 %v1439, %v1633
      %v1645 = vadd.f32 %v1444, %v1638
      %v1646 = vld [vmem:[%s9] sm:$0x1]
      %v1648 = vlaneseq
      %v1649 = vshrl.u32 %v1648, 7
      %v1650 = vsub.s32 0, %v1649
      %v1651 = vrot.slane %v1646, %v1650
      %v1653 = vadd.f32 %v1643, %v1651
      %v1654 = vadd.f32 %v1644, %v1651
      %v1655 = vadd.f32 %v1645, %v1651
      %vm1656 = vcmp.ge.f32.partialorder %v1653, 0.0
      %vm1657 = vcmp.ge.f32.partialorder %v1654, 0.0
      %vm1658 = vcmp.ge.f32.partialorder %v1655, 0.0
      %v1659 = vmul.f32 %v1653, 0.2
      %v1660 = vmul.f32 %v1654, 0.2
      %v1661 = vmul.f32 %v1655, 0.2
      %v1662 = vsel %vm1656, %v1653, %v1659
      %v1663 = vsel %vm1657, %v1654, %v1660
      %v1664 = vsel %vm1658, %v1655, %v1661
      %v1665 = vadd.s32 %v825, 16
      %s1666 = smul.u32 %s28, 16
      %s1667 = ssub.s32 %s1666, 1
      %v1668 = vstv %s1667
      %v1669 = vadd.s32 %v1668, %v825
      %v1670 = vadd.s32 %v1668, %v904
      %v1671 = vadd.s32 %v1668, %v1665
      %vm1672 = vcmp.ge.s32.totalorder %v1669, 0
      %vm1673 = vcmp.ge.s32.totalorder %v1670, 0
      %vm1674 = vcmp.ge.s32.totalorder %v1671, 0
      %vm1675 = vcmp.lt.s32.totalorder %v1669, 16
      %vm1676 = vcmp.lt.s32.totalorder %v1670, 16
      %vm1677 = vcmp.lt.s32.totalorder %v1671, 16
      %vm1678 = vmand %vm1672, %vm1675
      %vm1679 = vmand %vm1673, %vm1676
      %vm1680 = vmand %vm1674, %vm1677
      %v1681 = vsel %vm1678, 1, 0
      %v1682 = vsel %vm1679, 1, 0
      %v1683 = vsel %vm1680, 1, 0
      %vm1684 = vcmp.eq.s32.totalorder %v1681, 1
      %vm1685 = vcmp.eq.s32.totalorder %v1682, 1
      %vm1686 = vcmp.eq.s32.totalorder %v1683, 1
      %v1687 = vsel %vm1684, %v1662, 0.0
      %v1688 = vsel %vm1685, %v1663, 0.0
      %v1689 = vsel %vm1686, %v1664, 0.0
      %v1690 = vpack.c.bf16 %v1688, %v1687
      %v1691 = vpack.c.bf16 %v1689, %v1689
      %v1694 = vunpack.c.l.b16 %v1690
      %v1695 = vunpack.c.h.b16 %v1690
      %v1696 = vunpack.c.l.b16 %v1691
      %v1697 = vpack.c.b16 %v1694, %v1694
      %v1698 = vpack.c.b16 %v1695, %v1695
      %v1699 = vpack.c.b16 %v1696, %v1696
      %1703 = vst [vmem:[#allocation3] sm:$0xf] %v1697
      %1704 = vst [vmem:[#allocation3 + $0x4] sm:$0xf] %v1698
      %1705 = vst [vmem:[#allocation3 + $0x8] sm:$0x1] %v1699
      %v1706 = vld [vmem:[#allocation3] sm:$0xf]
      %v1707 = vld [vmem:[#allocation3 + $0x4] sm:$0xf]
      %v1708 = vld [vmem:[%s10] sm:$0xf]
      %v1709 = vld [vmem:[%s10 + $0x4] sm:$0xf]
      %v1710 = vld [vmem:[%s10 + $0x8] sm:$0xf]
      %v1711 = vld [vmem:[%s10 + $0xc] sm:$0xf]
      %v1712 = vld [vmem:[%s10 + $0x10] sm:$0xf]
      %v1713 = vld [vmem:[%s10 + $0x14] sm:$0xf]
      %v1714 = vld [vmem:[%s10 + $0x18] sm:$0xf]
      %v1715 = vld [vmem:[%s10 + $0x1c] sm:$0xf]
      %v1716 = vld [vmem:[%s10 + $0x20] sm:$0xf]
      %v1717 = vld [vmem:[%s10 + $0x24] sm:$0xf]
      %v1718 = vld [vmem:[%s10 + $0x28] sm:$0xf]
      %v1719 = vld [vmem:[%s10 + $0x2c] sm:$0xf]
      %v1720 = vld [vmem:[%s10 + $0x30] sm:$0xf]
      %v1721 = vld [vmem:[%s10 + $0x34] sm:$0xf]
      %v1722 = vld [vmem:[%s10 + $0x38] sm:$0xf]
      %v1723 = vld [vmem:[%s10 + $0x3c] sm:$0xf]
      %v1724 = vld [vmem:[#allocation3 + $0x8] sm:$0x1]
      %s1725 = scalar_lea.vmem %s10, 64
      %v1726 = vld [vmem:[%s1725] sm:$0xf]
      %v1727 = vld [vmem:[%s1725 + $0x4] sm:$0xf]
      %v1728 = vld [vmem:[%s1725 + $0x8] sm:$0xf]
      %v1729 = vld [vmem:[%s1725 + $0xc] sm:$0xf]
      %v1730 = vld [vmem:[%s1725 + $0x10] sm:$0xf]
      %v1731 = vld [vmem:[%s1725 + $0x14] sm:$0xf]
      %v1732 = vld [vmem:[%s1725 + $0x18] sm:$0xf]
      %v1733 = vld [vmem:[%s1725 + $0x1c] sm:$0xf]
      %v1734 = vld [vmem:[%s1725 + $0x20] sm:$0xf]
      %v1735 = vld [vmem:[%s1725 + $0x24] sm:$0xf]
      %v1736 = vld [vmem:[%s1725 + $0x28] sm:$0xf]
      %v1737 = vld [vmem:[%s1725 + $0x2c] sm:$0xf]
      %v1738 = vld [vmem:[%s1725 + $0x30] sm:$0xf]
      %v1739 = vld [vmem:[%s1725 + $0x34] sm:$0xf]
      %v1740 = vld [vmem:[%s1725 + $0x38] sm:$0xf]
      %v1741 = vld [vmem:[%s1725 + $0x3c] sm:$0xf]
      %v1745 = vunpack.c.l.b16 %v1706
      %v1746 = vunpack.c.l.b16 %v1707
      %v1747 = vunpack.c.l.b16 %v1724
      %v1748 = vpack.c.b16 %v1746, %v1745
      %v1749 = vpack.c.b16 %v1747, %v1747
      %v1751 = vshrl.u32 %v1748, 16
      %v1753 = vshll.u32 %v1748, 16
      %v1755 = vrot.slane %v1753, 1
      %v1756 = vor.u32 %v1751, %v1755
      %v1758 = vshll.u32 %v1749, 16
      %v1760 = vrot.slane %v1758, 1
      %v1761 = vsel %vm1117, %v1756, %v1760
      %v1779 = vunpack.c.l.b16 %v1726
      %v1780 = vunpack.c.l.b16 %v1727
      %v1781 = vunpack.c.l.b16 %v1728
      %v1782 = vunpack.c.l.b16 %v1729
      %v1783 = vunpack.c.l.b16 %v1730
      %v1784 = vunpack.c.l.b16 %v1731
      %v1785 = vunpack.c.l.b16 %v1732
      %v1786 = vunpack.c.l.b16 %v1733
      %v1787 = vunpack.c.l.b16 %v1734
      %v1788 = vunpack.c.l.b16 %v1735
      %v1789 = vunpack.c.l.b16 %v1736
      %v1790 = vunpack.c.l.b16 %v1737
      %v1791 = vunpack.c.l.b16 %v1738
      %v1792 = vunpack.c.l.b16 %v1739
      %v1793 = vunpack.c.l.b16 %v1740
      %v1794 = vunpack.c.l.b16 %v1741
      %v1795 = vpack.c.b16 %v1780, %v1779
      %v1796 = vpack.c.b16 %v1782, %v1781
      %v1797 = vpack.c.b16 %v1784, %v1783
      %v1798 = vpack.c.b16 %v1786, %v1785
      %v1799 = vpack.c.b16 %v1788, %v1787
      %v1800 = vpack.c.b16 %v1790, %v1789
      %v1801 = vpack.c.b16 %v1792, %v1791
      %v1802 = vpack.c.b16 %v1794, %v1793
      %1811 = vmatprep.subr.bf16.mxu0 0
      %1812 = vmatpush1.bf16.msra.mxu0 %v1795
      %1813 = vmatprep.subr.bf16.mxu0 0
      %1814 = vmatpush1.bf16.msra.mxu0 %v1796
      %1815 = vmatprep.subr.bf16.mxu0 0
      %1816 = vmatpush1.bf16.msra.mxu0 %v1797
      %1817 = vmatprep.subr.bf16.mxu0 0
      %1818 = vmatpush1.bf16.msra.mxu0 %v1798
      %1819 = vmatprep.subr.bf16.mxu0 0
      %1820 = vmatpush1.bf16.msra.mxu0 %v1799
      %1821 = vmatprep.subr.bf16.mxu0 0
      %1822 = vmatpush1.bf16.msra.mxu0 %v1800
      %1823 = vmatprep.subr.bf16.mxu0 0
      %1824 = vmatpush1.bf16.msra.mxu0 %v1801
      %1825 = vmatprep.subr.bf16.mxu0 0
      %1826 = vmatpush1.bf16.msra.mxu0 %v1802
      %1827 = vmatprep.subr.bf16.mxu0 0
      %1828 = vmatpush1.bf16.msra.mxu0 0
      %1829 = vmatprep.subr.bf16.mxu0 0
      %1830 = vmatpush1.bf16.msra.mxu0 0
      %1831 = vmatprep.subr.bf16.mxu0 0
      %1832 = vmatpush1.bf16.msra.mxu0 0
      %1833 = vmatprep.subr.bf16.mxu0 0
      %1834 = vmatpush1.bf16.msra.mxu0 0
      %1835 = vmatprep.subr.bf16.mxu0 0
      %1836 = vmatpush1.bf16.msra.mxu0 0
      %1837 = vmatprep.subr.bf16.mxu0 0
      %1838 = vmatpush1.bf16.msra.mxu0 0
      %1839 = vmatprep.subr.bf16.mxu0 0
      %1840 = vmatpush1.bf16.msra.mxu0 0
      %1841 = vmatprep.subr.bf16.mxu0 0
      %1842 = vmatpush1.bf16.msra.mxu0 0
      %1843 = vmatprep.mubr.bf16.mxu0 0
      %1844 = vmatmul.mubr.bf16.gmra.mrb[0].mxu0 %v1761
      %v1845 = vpop.f32.mrb[0].mxu0
      %v1846 = vadd.f32 0.0, %v1845
      %v1847 = vpop.f32.mrb[0].mxu0
      %v1848 = vpop.f32.mrb[0].mxu0
      %v1849 = vadd.f32 0.0, %v1848
      %v1850 = vpop.f32.mrb[0].mxu0
      %1851 = vdwg.mxu0
      %v1869 = vunpack.c.l.b16 %v1708
      %v1870 = vunpack.c.l.b16 %v1709
      %v1871 = vunpack.c.l.b16 %v1710
      %v1872 = vunpack.c.l.b16 %v1711
      %v1873 = vunpack.c.l.b16 %v1712
      %v1874 = vunpack.c.l.b16 %v1713
      %v1875 = vunpack.c.l.b16 %v1714
      %v1876 = vunpack.c.l.b16 %v1715
      %v1877 = vunpack.c.l.b16 %v1716
      %v1878 = vunpack.c.l.b16 %v1717
      %v1879 = vunpack.c.l.b16 %v1718
      %v1880 = vunpack.c.l.b16 %v1719
      %v1881 = vunpack.c.l.b16 %v1720
      %v1882 = vunpack.c.l.b16 %v1721
      %v1883 = vunpack.c.l.b16 %v1722
      %v1884 = vunpack.c.l.b16 %v1723
      %v1885 = vpack.c.b16 %v1870, %v1869
      %v1886 = vpack.c.b16 %v1872, %v1871
      %v1887 = vpack.c.b16 %v1874, %v1873
      %v1888 = vpack.c.b16 %v1876, %v1875
      %v1889 = vpack.c.b16 %v1878, %v1877
      %v1890 = vpack.c.b16 %v1880, %v1879
      %v1891 = vpack.c.b16 %v1882, %v1881
      %v1892 = vpack.c.b16 %v1884, %v1883
      %1901 = vmatprep.subr.bf16.mxu0 0
      %1902 = vmatpush1.bf16.msra.mxu0 %v1885
      %1903 = vmatprep.subr.bf16.mxu0 0
      %1904 = vmatpush1.bf16.msra.mxu0 %v1886
      %1905 = vmatprep.subr.bf16.mxu0 0
      %1906 = vmatpush1.bf16.msra.mxu0 %v1887
      %1907 = vmatprep.subr.bf16.mxu0 0
      %1908 = vmatpush1.bf16.msra.mxu0 %v1888
      %1909 = vmatprep.subr.bf16.mxu0 0
      %1910 = vmatpush1.bf16.msra.mxu0 %v1889
      %1911 = vmatprep.subr.bf16.mxu0 0
      %1912 = vmatpush1.bf16.msra.mxu0 %v1890
      %1913 = vmatprep.subr.bf16.mxu0 0
      %1914 = vmatpush1.bf16.msra.mxu0 %v1891
      %1915 = vmatprep.subr.bf16.mxu0 0
      %1916 = vmatpush1.bf16.msra.mxu0 %v1892
      %1917 = vmatprep.subr.bf16.mxu0 0
      %1918 = vmatpush1.bf16.msra.mxu0 0
      %1919 = vmatprep.subr.bf16.mxu0 0
      %1920 = vmatpush1.bf16.msra.mxu0 0
      %1921 = vmatprep.subr.bf16.mxu0 0
      %1922 = vmatpush1.bf16.msra.mxu0 0
      %1923 = vmatprep.subr.bf16.mxu0 0
      %1924 = vmatpush1.bf16.msra.mxu0 0
      %1925 = vmatprep.subr.bf16.mxu0 0
      %1926 = vmatpush1.bf16.msra.mxu0 0
      %1927 = vmatprep.subr.bf16.mxu0 0
      %1928 = vmatpush1.bf16.msra.mxu0 0
      %1929 = vmatprep.subr.bf16.mxu0 0
      %1930 = vmatpush1.bf16.msra.mxu0 0
      %1931 = vmatprep.subr.bf16.mxu0 0
      %1932 = vmatpush1.bf16.msra.mxu0 0
      %1933 = vmatprep.mubr.bf16.mxu0 0
      %1934 = vmatmul.mubr.bf16.gmra.mrb[0].mxu0 %v1748
      %v1935 = vpop.f32.mrb[0].mxu0
      %v1936 = vadd.f32 %v1846, %v1935
      %v1937 = vpop.f32.mrb[0].mxu0
      %v1938 = vpop.f32.mrb[0].mxu0
      %v1939 = vadd.f32 %v1849, %v1938
      %v1940 = vpop.f32.mrb[0].mxu0
      %1941 = vdwg.mxu0
      %v1942 = vld [vmem:[#allocation3] sm:$0xe]
      %s1943 = scalar_lea.vmem %s10, 128
      %v1944 = vld [vmem:[%s1943] sm:$0xf]
      %v1945 = vld [vmem:[%s1943 + $0x4] sm:$0xf]
      %v1946 = vld [vmem:[%s1943 + $0x8] sm:$0xf]
      %v1947 = vld [vmem:[%s1943 + $0xc] sm:$0xf]
      %v1948 = vld [vmem:[%s1943 + $0x10] sm:$0xf]
      %v1949 = vld [vmem:[%s1943 + $0x14] sm:$0xf]
      %v1950 = vld [vmem:[%s1943 + $0x18] sm:$0xf]
      %v1951 = vld [vmem:[%s1943 + $0x1c] sm:$0xf]
      %v1952 = vld [vmem:[%s1943 + $0x20] sm:$0xf]
      %v1953 = vld [vmem:[%s1943 + $0x24] sm:$0xf]
      %v1954 = vld [vmem:[%s1943 + $0x28] sm:$0xf]
      %v1955 = vld [vmem:[%s1943 + $0x2c] sm:$0xf]
      %v1956 = vld [vmem:[%s1943 + $0x30] sm:$0xf]
      %v1957 = vld [vmem:[%s1943 + $0x34] sm:$0xf]
      %v1958 = vld [vmem:[%s1943 + $0x38] sm:$0xf]
      %v1959 = vld [vmem:[%s1943 + $0x3c] sm:$0xf]
      %v1961 = vunpack.c.l.b16 %v1942
      %v1962 = vpack.c.b16 %v1746, %v1961
      %v1963 = vrot.slane %v1962, 1
      %v1964 = vrot.slane %v1749, 1
      %v1965 = vsel %vm1488, %v1963, %v1964
      %v1983 = vunpack.c.l.b16 %v1944
      %v1984 = vunpack.c.l.b16 %v1945
      %v1985 = vunpack.c.l.b16 %v1946
      %v1986 = vunpack.c.l.b16 %v1947
      %v1987 = vunpack.c.l.b16 %v1948
      %v1988 = vunpack.c.l.b16 %v1949
      %v1989 = vunpack.c.l.b16 %v1950
      %v1990 = vunpack.c.l.b16 %v1951
      %v1991 = vunpack.c.l.b16 %v1952
      %v1992 = vunpack.c.l.b16 %v1953
      %v1993 = vunpack.c.l.b16 %v1954
      %v1994 = vunpack.c.l.b16 %v1955
      %v1995 = vunpack.c.l.b16 %v1956
      %v1996 = vunpack.c.l.b16 %v1957
      %v1997 = vunpack.c.l.b16 %v1958
      %v1998 = vunpack.c.l.b16 %v1959
      %v1999 = vpack.c.b16 %v1984, %v1983
      %v2000 = vpack.c.b16 %v1986, %v1985
      %v2001 = vpack.c.b16 %v1988, %v1987
      %v2002 = vpack.c.b16 %v1990, %v1989
      %v2003 = vpack.c.b16 %v1992, %v1991
      %v2004 = vpack.c.b16 %v1994, %v1993
      %v2005 = vpack.c.b16 %v1996, %v1995
      %v2006 = vpack.c.b16 %v1998, %v1997
      %2015 = vmatprep.subr.bf16.mxu0 0
      %2016 = vmatpush1.bf16.msra.mxu0 %v1999
      %2017 = vmatprep.subr.bf16.mxu0 0
      %2018 = vmatpush1.bf16.msra.mxu0 %v2000
      %2019 = vmatprep.subr.bf16.mxu0 0
      %2020 = vmatpush1.bf16.msra.mxu0 %v2001
      %2021 = vmatprep.subr.bf16.mxu0 0
      %2022 = vmatpush1.bf16.msra.mxu0 %v2002
      %2023 = vmatprep.subr.bf16.mxu0 0
      %2024 = vmatpush1.bf16.msra.mxu0 %v2003
      %2025 = vmatprep.subr.bf16.mxu0 0
      %2026 = vmatpush1.bf16.msra.mxu0 %v2004
      %2027 = vmatprep.subr.bf16.mxu0 0
      %2028 = vmatpush1.bf16.msra.mxu0 %v2005
      %2029 = vmatprep.subr.bf16.mxu0 0
      %2030 = vmatpush1.bf16.msra.mxu0 %v2006
      %2031 = vmatprep.subr.bf16.mxu0 0
      %2032 = vmatpush1.bf16.msra.mxu0 0
      %2033 = vmatprep.subr.bf16.mxu0 0
      %2034 = vmatpush1.bf16.msra.mxu0 0
      %2035 = vmatprep.subr.bf16.mxu0 0
      %2036 = vmatpush1.bf16.msra.mxu0 0
      %2037 = vmatprep.subr.bf16.mxu0 0
      %2038 = vmatpush1.bf16.msra.mxu0 0
      %2039 = vmatprep.subr.bf16.mxu0 0
      %2040 = vmatpush1.bf16.msra.mxu0 0
      %2041 = vmatprep.subr.bf16.mxu0 0
      %2042 = vmatpush1.bf16.msra.mxu0 0
      %2043 = vmatprep.subr.bf16.mxu0 0
      %2044 = vmatpush1.bf16.msra.mxu0 0
      %2045 = vmatprep.subr.bf16.mxu0 0
      %2046 = vmatpush1.bf16.msra.mxu0 0
      %2047 = vmatprep.mubr.bf16.mxu0 0
      %2048 = vmatmul.mubr.bf16.gmra.mrb[0].mxu0 %v1965
      %v2049 = vpop.f32.mrb[0].mxu0
      %v2050 = vadd.f32 0.0, %v2049
      %v2051 = vpop.f32.mrb[0].mxu0
      %v2052 = vpop.f32.mrb[0].mxu0
      %v2053 = vadd.f32 0.0, %v2052
      %v2054 = vpop.f32.mrb[0].mxu0
      %2055 = vdwg.mxu0
      %v2056 = vadd.f32 %v1936, %v2050
      %v2057 = vadd.f32 %v1939, %v2053
      %v2058 = vld [vmem:[%s11] sm:$0x1]
      %v2060 = vlaneseq
      %v2061 = vshrl.u32 %v2060, 7
      %v2062 = vsub.s32 0, %v2061
      %v2063 = vrot.slane %v2058, %v2062
      %v2065 = vadd.f32 %v2056, %v2063
      %v2066 = vadd.f32 %v2057, %v2063
      %vm2067 = vcmp.ge.f32.partialorder %v2065, 0.0
      %vm2068 = vcmp.ge.f32.partialorder %v2066, 0.0
      %v2069 = vmul.f32 %v2065, 0.2
      %v2070 = vmul.f32 %v2066, 0.2
      %v2071 = vsel %vm2067, %v2065, %v2069
      %v2072 = vsel %vm2068, %v2066, %v2070
      %2073 = vst [vmem:[%s723] sm:$0xff] %v2071
      %2074 = vst [vmem:[%s723 + $0x8] sm:$0xff] %v2072
      %s2075 = smul.u32 2, %s28
      %p2076 = scmp.lt.s32.totalorder %s27, 1
      %s2077 = scalar_select %p2076, %s27, 1
      %p2078 = scmp.lt.s32.totalorder %s2075, 1
      %s2079 = scalar_select %p2078, %s2075, 1
      %s2080 = smul.addr %s2077, 2
      %s2081 = sadd.s32 %s2079, %s2080
      %s2082 = smul.addr %s2081, 8
      %s2083 = scalar_lea.vmem %s12, %s2082
      // Predicated region
      $region69: #{decoder_block_forward.1} parent=67 // pred_check
        %p2084 = pneg %p381
      $region70: #{decoder_block_forward.1} parent=67 // pred_check_branch
        %2086 = sbr.rel (%p2084) target = $region72
      $region71: #{decoder_block_forward.1} parent=67 // pred_region
        %s2087 = smul.u32 2, %s28
      $region72: #{decoder_block_forward.1} parent=67 // pred_fallthru
        _
    $region68: #{decoder_block_forward.1} parent=5 // pred_fallthru
      _
    %p2088 = scmp.le.s32.totalorder 2, %s18
    // Predicated region
    $region73: #{decoder_block_forward.1} parent=5 // pred_check
      %p2089 = pneg %p2088
    $region74: #{decoder_block_forward.1} parent=5 // pred_check_branch
      %2091 = sbr.rel (%p2089) target = $region76
    $region75: #{decoder_block_forward.1} parent=5 // pred_region
      %s2092 = ssub.s32 %s18, 2
      // Predicated region
      $region77: #{decoder_block_forward.1} parent=75 // pred_check
        %p2093 = pneg %p387
      $region78: #{decoder_block_forward.1} parent=75 // pred_check_branch
        %2095 = sbr.rel (%p2093) target = $region80
      $region79: #{decoder_block_forward.1} parent=75 // pred_region
        %s2096 = smul.u32 2, %s30
        %p2097 = scmp.lt.s32.totalorder %s29, 1
        %s2098 = scalar_select %p2097, %s29, 1
        %p2099 = scmp.lt.s32.totalorder %s2096, 1
        %s2100 = scalar_select %p2099, %s2096, 1
        %s2101 = smul.addr %s2098, 2
        %s2102 = sadd.s32 %s2100, %s2101
        %s2103 = smul.addr %s2102, 8
        %s2104 = scalar_lea.vmem %s12, %s2103
      $region80: #{decoder_block_forward.1} parent=75 // pred_fallthru
        _
    $region76: #{decoder_block_forward.1} parent=5 // pred_fallthru
      _
  $region6: #{decoder_block_forward.1} parent=0 // loop_footer
    %s22 = sadd.s32 1, %s18
  $region7: #{decoder_block_forward.1} parent=0 // loop_footer_branch
    %17 = sbr.rel target = $region3
  $region8: #{decoder_block_forward.1} parent=0 // loop_exit
    _

</llo_original>
